<compile_context>
chip_gen: v6e
topology: v6e:2x2x1
jax: 0.10.0
libtpu: 0.0.40
codegen_flags: <defaults>
</compile_context>

<pallas_src>
import jax
import jax.numpy as jnp
from jax import lax
from jax.experimental import pallas as pl
from jax.experimental.pallas import tpu as pltpu


# ----------------------------------------------------------------------------
# Embedding gather: ids in SMEM, table in HBM, one row DMA per token.
# padding_idx=0 is honored because table row 0 is zero.
# ----------------------------------------------------------------------------
def _embedding_gather_kernel(ids_ref, table_ref, o_ref, sems):
    n = o_ref.shape[0]
    vmax = table_ref.shape[0] - 1

    def issue(i, carry):
        row = jnp.clip(ids_ref[i], 0, vmax)          # bounds-safe id
        pltpu.make_async_copy(
            table_ref.at[pl.ds(row, 1), :],
            o_ref.at[pl.ds(i, 1), :],
            sems.at[i],
        ).start()
        return carry

    lax.fori_loop(0, n, issue, 0, unroll=False)

    def drain(i, carry):
        # dummy descriptor with matching (1, E) size, just to wait on sems[i]
        pltpu.make_async_copy(
            table_ref.at[pl.ds(0, 1), :],
            o_ref.at[pl.ds(0, 1), :],
            sems.at[i],
        ).wait()
        return carry

    lax.fori_loop(0, n, drain, 0, unroll=False)


def embedding_lookup(ids_flat, table):
    """ids_flat: (N,) int32, table: (V, E) f32 in HBM -> (N, E) f32."""
    N = ids_flat.shape[0]
    _, E = table.shape
    return pl.pallas_call(
        _embedding_gather_kernel,
        out_shape=jax.ShapeDtypeStruct((N, E), jnp.float32),
        in_specs=[pl.BlockSpec(memory_space=pltpu.MemorySpace.SMEM),
                  pl.BlockSpec(memory_space=pl.ANY)],
        out_specs=pl.BlockSpec(memory_space=pltpu.MemorySpace.VMEM),
        scratch_shapes=[pltpu.SemaphoreType.DMA((N,))],
        compiler_params=pltpu.CompilerParams(vmem_limit_bytes=32 * 1024 * 1024),
    )(ids_flat, table)


# ----------------------------------------------------------------------------
# Fused BiLSTM layer: input projection (big MXU matmul) + serial recurrence in
# one kernel.  Inputs / outputs are flat time-major (T*B, F); the per-step
# recurrent matmul is a single block-diagonal h_cat @ Whh_blk push.
# Gate order (columns of all packed weights): [i | f | o | g] per direction.
# ----------------------------------------------------------------------------
def _make_bilstm_kernel(part_dims, hidden, batch, seq):
    num_parts = len(part_dims)
    H, B, T = hidden, batch, seq
    G4 = 4 * H

    def kernel(*refs):
        x_refs = refs[:num_parts]
        wih_ref, b_ref, whh_ref = refs[num_parts:num_parts + 3]
        hf_ref, hb_ref = refs[num_parts + 3:num_parts + 5]
        gx_ref = refs[num_parts + 5]

        # ---- prologue: hoisted input projection for all timesteps / both dirs
        acc = None
        off = 0
        for p, dp in enumerate(part_dims):
            xp = x_refs[p][...].astype(jnp.bfloat16)          # (T*B, dp)
            wp = wih_ref[off:off + dp, :]                     # (dp, 8H) bf16
            c = jnp.dot(xp, wp, preferred_element_type=jnp.float32)
            acc = c if acc is None else acc + c
            off += dp
        gx_ref[...] = acc + b_ref[...]                        # (T*B, 8H) f32

        whh = whh_ref[...]                                    # (2H, 8H) f32 block-diag

        def gate_math(pre, c):
            ifo = jax.nn.sigmoid(pre[:, :3 * H])              # one EUP launch
            g = jnp.tanh(pre[:, 3 * H:])
            i = ifo[:, :H]
            f = ifo[:, H:2 * H]
            o = ifo[:, 2 * H:]
            c_new = f * c + i * g
            h_new = o * jnp.tanh(c_new)
            return h_new, c_new

        def body(t, carry):
            h_f, c_f, h_b, c_b = carry
            tb = T - 1 - t
            rf = pl.multiple_of(t * B, B)
            rb = pl.multiple_of(tb * B, B)

            # single fused MXU push for both directions (f32: no per-step
            # bf16 rounding on the recurrent state)
            h_cat = jnp.concatenate([h_f, h_b], axis=1)       # (B, 2H)
            g_cat = jnp.dot(h_cat, whh, preferred_element_type=jnp.float32)

            pre_f = gx_ref[pl.ds(rf, B), :G4] + g_cat[:, :G4]
            pre_b = gx_ref[pl.ds(rb, B), G4:] + g_cat[:, G4:]

            h_f, c_f = gate_math(pre_f, c_f)
            h_b, c_b = gate_math(pre_b, c_b)

            hf_ref[pl.ds(rf, B), :] = h_f
            hb_ref[pl.ds(rb, B), :] = h_b
            return (h_f, c_f, h_b, c_b)

        # TODO(synk): at production B*H keep h/c in VMEM scratch, not carries.
        z = jnp.zeros((B, H), jnp.float32)
        lax.fori_loop(0, T, body, (z, z, z, z), unroll=False)

    return kernel


def bilstm_layer(x_parts, p, *, batch, seq):
    """x_parts: list of flat time-major (T*B, Dp) inputs -> (hf, hb) each (T*B, H)."""
    T, B = seq, batch
    H = p["whh_blk"].shape[0] // 2
    part_dims = tuple(int(xp.shape[1]) for xp in x_parts)
    vmem = pl.BlockSpec(memory_space=pltpu.MemorySpace.VMEM)
    # TODO(synk): time-chunk + double-buffer gx / outputs for production T*B*H.
    return pl.pallas_call(
        _make_bilstm_kernel(part_dims, H, B, T),
        out_shape=(jax.ShapeDtypeStruct((T * B, H), jnp.float32),
                   jax.ShapeDtypeStruct((T * B, H), jnp.float32)),
        in_specs=[vmem] * (len(x_parts) + 3),
        out_specs=(vmem, vmem),
        scratch_shapes=[pltpu.VMEM((T * B, 8 * H), jnp.float32)],
        compiler_params=pltpu.CompilerParams(vmem_limit_bytes=32 * 1024 * 1024),
    )(*x_parts, p["wih_cat"], p["b_cat"], p["whh_blk"])


# ----------------------------------------------------------------------------
# Fused vocab heads: pred_f = h_f @ Wf + bf, pred_b = h_b @ Wb + bb.
# Gridded over time (parallel); weights stay resident across grid steps.
# ----------------------------------------------------------------------------
def _dual_head_kernel(hf_ref, hb_ref, wf_ref, bf_ref, wb_ref, bb_ref,
                      pf_ref, pb_ref):
    hf = hf_ref[0].astype(jnp.bfloat16)                       # (B, H)
    hb = hb_ref[0].astype(jnp.bfloat16)
    pf_ref[0] = (jnp.dot(hf, wf_ref[...], preferred_element_type=jnp.float32)
                 + bf_ref[...])
    pb_ref[0] = (jnp.dot(hb, wb_ref[...], preferred_element_type=jnp.float32)
                 + bb_ref[...])


def vocab_heads(hf_tm, hb_tm, fc_f, fc_b):
    """hf_tm/hb_tm: (T, B, H) time-major -> two (T, B, V) predictions."""
    T, B, H = hf_tm.shape
    V = fc_f["w"].shape[1]
    # TODO(synk): also tile over V (and stream weight tiles) for production vocab.
    return pl.pallas_call(
        _dual_head_kernel,
        out_shape=(jax.ShapeDtypeStruct((T, B, V), jnp.float32),
                   jax.ShapeDtypeStruct((T, B, V), jnp.float32)),
        grid=(T,),
        in_specs=[
            pl.BlockSpec((1, B, H), lambda t: (t, 0, 0)),
            pl.BlockSpec((1, B, H), lambda t: (t, 0, 0)),
            pl.BlockSpec((H, V), lambda t: (0, 0)),
            pl.BlockSpec((1, V), lambda t: (0, 0)),
            pl.BlockSpec((H, V), lambda t: (0, 0)),
            pl.BlockSpec((1, V), lambda t: (0, 0)),
        ],
        out_specs=(pl.BlockSpec((1, B, V), lambda t: (t, 0, 0)),
                   pl.BlockSpec((1, B, V), lambda t: (t, 0, 0))),
        compiler_params=pltpu.CompilerParams(
            dimension_semantics=("parallel",),
            vmem_limit_bytes=32 * 1024 * 1024),
    )(hf_tm, hb_tm, fc_f["w"], fc_f["b"], fc_b["w"], fc_b["b"])


# ----------------------------------------------------------------------------
# Parameter init (deterministic, mirrors the nn.Module's shapes).
# Weight column order is [i | f | o | g] per direction (our own params, so
# this is only a packing convention shared with the kernel).
# ----------------------------------------------------------------------------
def _lstm_params(key, din, hidden):
    ks = jax.random.split(key, 8)

    def n(k, shape):
        return (0.1 * jax.random.normal(k, shape)).astype(jnp.float32)

    wih_f = n(ks[0], (din, 4 * hidden))
    whh_f = n(ks[1], (hidden, 4 * hidden))
    b_f = n(ks[2], (1, 4 * hidden)) + n(ks[3], (1, 4 * hidden))   # b_ih + b_hh
    wih_b = n(ks[4], (din, 4 * hidden))
    whh_b = n(ks[5], (hidden, 4 * hidden))
    b_b = n(ks[6], (1, 4 * hidden)) + n(ks[7], (1, 4 * hidden))

    zeros = jnp.zeros((hidden, 4 * hidden), jnp.float32)
    whh_blk = jnp.concatenate(
        [jnp.concatenate([whh_f, zeros], axis=1),
         jnp.concatenate([zeros, whh_b], axis=1)], axis=0)        # (2H, 8H)

    return {
        "wih_cat": jnp.concatenate([wih_f, wih_b], axis=1).astype(jnp.bfloat16),
        "b_cat": jnp.concatenate([b_f, b_b], axis=1),             # (1, 8H) f32
        "whh_blk": whh_blk,                                       # (2H, 8H) f32
    }


def init_params(key, vocab_size, embed_size, hidden_size):
    k_emb, k_l1, k_l2, k_ff, k_fb = jax.random.split(key, 5)
    emb = (0.1 * jax.random.normal(k_emb, (vocab_size, embed_size))
           ).astype(jnp.float32)
    emb = emb.at[0].set(0.0)                              # padding_idx = 0
    kffw, kffb = jax.random.split(k_ff)
    kfbw, kfbb = jax.random.split(k_fb)
    return {
        "embedding": emb,
        "lstm1": _lstm_params(k_l1, embed_size, hidden_size),
        "lstm2": _lstm_params(k_l2, 2 * hidden_size, hidden_size),
        "fc_forward": {
            "w": (0.1 * jax.random.normal(kffw, (hidden_size, vocab_size))
                  ).astype(jnp.bfloat16),
            "b": (0.1 * jax.random.normal(kffb, (1, vocab_size))
                  ).astype(jnp.float32),
        },
        "fc_backward": {
            "w": (0.1 * jax.random.normal(kfbw, (hidden_size, vocab_size))
                  ).astype(jnp.bfloat16),
            "b": (0.1 * jax.random.normal(kfbb, (1, vocab_size))
                  ).astype(jnp.float32),
        },
    }


# ----------------------------------------------------------------------------
# Full ELMo forward (matches ELMoModel.forward return signature, batch-first).
# ----------------------------------------------------------------------------
def elmo_forward(x, params):
    B, T = x.shape
    E = params["embedding"].shape[1]
    H = params["lstm1"]["whh_blk"].shape[0] // 2
    V = params["fc_forward"]["w"].shape[1]

    # flat time-major ids: row n = t * B + b
    ids_flat = jnp.transpose(x).reshape(T * B).astype(jnp.int32)

    e0_flat = embedding_lookup(ids_flat, params["embedding"])        # (T*B, E)

    hf1, hb1 = bilstm_layer([e0_flat], params["lstm1"], batch=B, seq=T)
    hf2, hb2 = bilstm_layer([hf1, hb1], params["lstm2"], batch=B, seq=T)

    pf_tm, pb_tm = vocab_heads(hf2.reshape(T, B, H), hb2.reshape(T, B, H),
                               params["fc_forward"], params["fc_backward"])

    # convert to PyTorch batch-first layout only at the boundary
    e0 = jnp.transpose(e0_flat.reshape(T, B, E), (1, 0, 2))
    out1 = jnp.transpose(
        jnp.concatenate([hf1, hb1], axis=1).reshape(T, B, 2 * H), (1, 0, 2))
    out2 = jnp.transpose(
        jnp.concatenate([hf2, hb2], axis=1).reshape(T, B, 2 * H), (1, 0, 2))
    pred_forward = jnp.transpose(pf_tm, (1, 0, 2))
    pred_backward = jnp.transpose(pb_tm, (1, 0, 2))
    return e0, out1, out2, pred_forward, pred_backward


if __name__ == "__main__":
    vocab_size, embed_size, hidden_size = 32, 16, 16
    batch, seq = 2, 8

    key = jax.random.PRNGKey(0)
    params = init_params(key, vocab_size, embed_size, hidden_size)

    x = jax.random.randint(jax.random.fold_in(key, 123),
                           (batch, seq), 0, vocab_size, dtype=jnp.int32)
    x = x.at[:, -1].set(0)                               # include a padding token

    outs = jax.jit(elmo_forward)(x, params)
    outs = jax.block_until_ready(outs)

    e0, out1, out2, pf, pb = outs
    assert e0.shape == (batch, seq, embed_size)
    assert out1.shape == (batch, seq, 2 * hidden_size)
    assert out2.shape == (batch, seq, 2 * hidden_size)
    assert pf.shape == (batch, seq, vocab_size)
    assert pb.shape == (batch, seq, vocab_size)
    for t in (e0, out1, out2, pf, pb):
        assert bool(jnp.all(jnp.isfinite(t)))
    # padding token (id 0) must embed to zeros
    assert bool(jnp.all(e0[:, -1, :] == 0.0))
    print("KERNEL_OK")
</pallas_src>

<mosaic_0001>
module attributes {stable_mosaic.version = 11 : i64} {
  func.func @_embedding_gather_kernel(%arg0: memref<16xi32, #tpu.memory_space<smem>>, %arg1: memref<32x16xf32, #tpu.memory_space<any>>, %arg2: memref<16x16xf32, #tpu.memory_space<vmem>>, %arg3: memref<16x!tpu.dma_semaphore, #tpu.memory_space<semaphore_mem>>) attributes {dimension_semantics = [], scalar_prefetch = 0 : i64, scratch_operands = 1 : i64, tpu.core_type = #tpu.core_type<tc>} {
    %c0_i32 = arith.constant 0 : i32
    %c16_i32 = arith.constant 16 : i32
    %0 = arith.addi %c0_i32, %c16_i32 : i32
    %c1_i32 = arith.constant 1 : i32
    scf.for %arg4 = %c0_i32 to %0 step %c1_i32  : i32 {
      %2 = arith.index_cast %arg4 : i32 to index
      %3 = memref.load %arg0[%2] : memref<16xi32, #tpu.memory_space<smem>>
      %c0_i32_5 = arith.constant 0 : i32
      %c31_i32 = arith.constant 31 : i32
      %4 = arith.maxsi %c0_i32_5, %3 : i32
      %5 = arith.minsi %c31_i32, %4 : i32
      %c0_i32_6 = arith.constant 0 : i32
      %6 = tpu.memref_slice %arg1[%5, %c0_i32_6] : memref<32x16xf32, #tpu.memory_space<any>> -> memref<1x16xf32, #tpu.memory_space<any>>
      %c0_i32_7 = arith.constant 0 : i32
      %7 = tpu.memref_slice %arg2[%arg4, %c0_i32_7] : memref<16x16xf32, #tpu.memory_space<vmem>> -> memref<1x16xf32, #tpu.memory_space<vmem>>
      %8 = tpu.memref_slice %arg3[%arg4] : memref<16x!tpu.dma_semaphore, #tpu.memory_space<semaphore_mem>> -> memref<1x!tpu.dma_semaphore, #tpu.memory_space<semaphore_mem>>
      %9 = tpu.memref_squeeze %8 : memref<1x!tpu.dma_semaphore, #tpu.memory_space<semaphore_mem>> -> memref<!tpu.dma_semaphore, #tpu.memory_space<semaphore_mem>>
      tpu.enqueue_dma source(%6 : memref<1x16xf32, #tpu.memory_space<any>>) target(%7 : memref<1x16xf32, #tpu.memory_space<vmem>>) target_semaphore(%9 : memref<!tpu.dma_semaphore, #tpu.memory_space<semaphore_mem>>)
    }
    %c16_i32_0 = arith.constant 16 : i32
    %c0_i32_1 = arith.constant 0 : i32
    %c16_i32_2 = arith.constant 16 : i32
    %1 = arith.addi %c0_i32_1, %c16_i32_2 : i32
    %c1_i32_3 = arith.constant 1 : i32
    scf.for %arg4 = %c0_i32_1 to %1 step %c1_i32_3  : i32 {
      %c0_i32_5 = arith.constant 0 : i32
      %c0_i32_6 = arith.constant 0 : i32
      %2 = tpu.memref_slice %arg1[%c0_i32_5, %c0_i32_6] : memref<32x16xf32, #tpu.memory_space<any>> -> memref<1x16xf32, #tpu.memory_space<any>>
      %c0_i32_7 = arith.constant 0 : i32
      %c0_i32_8 = arith.constant 0 : i32
      %3 = tpu.memref_slice %arg2[%c0_i32_7, %c0_i32_8] : memref<16x16xf32, #tpu.memory_space<vmem>> -> memref<1x16xf32, #tpu.memory_space<vmem>>
      %4 = tpu.memref_slice %arg3[%arg4] : memref<16x!tpu.dma_semaphore, #tpu.memory_space<semaphore_mem>> -> memref<1x!tpu.dma_semaphore, #tpu.memory_space<semaphore_mem>>
      %5 = tpu.memref_squeeze %4 : memref<1x!tpu.dma_semaphore, #tpu.memory_space<semaphore_mem>> -> memref<!tpu.dma_semaphore, #tpu.memory_space<semaphore_mem>>
      tpu.wait_dma2 semaphore(%5 : memref<!tpu.dma_semaphore, #tpu.memory_space<semaphore_mem>>) src(%2 : memref<1x16xf32, #tpu.memory_space<any>>) dst(%3 : memref<1x16xf32, #tpu.memory_space<vmem>>)
    }
    %c16_i32_4 = arith.constant 16 : i32
    return
  }
}

module attributes {stable_mosaic.version = 11 : i64} {
  func.func @kernel(%arg0: memref<16x16xf32, #tpu.memory_space<vmem>>, %arg1: memref<16x128xbf16, #tpu.memory_space<vmem>>, %arg2: memref<1x128xf32, #tpu.memory_space<vmem>>, %arg3: memref<32x128xf32, #tpu.memory_space<vmem>>, %arg4: memref<16x16xf32, #tpu.memory_space<vmem>>, %arg5: memref<16x16xf32, #tpu.memory_space<vmem>>, %arg6: memref<16x128xf32, #tpu.memory_space<vmem>>) attributes {dimension_semantics = [], scalar_prefetch = 0 : i64, scratch_operands = 1 : i64, tpu.core_type = #tpu.core_type<tc>} {
    %c0 = arith.constant 0 : index
    %c0_0 = arith.constant 0 : index
    %0 = vector.load %arg0[%c0, %c0_0] : memref<16x16xf32, #tpu.memory_space<vmem>>, vector<16x16xf32>
    %1 = arith.truncf %0 : vector<16x16xf32> to vector<16x16xbf16>
    %c0_1 = arith.constant 0 : index
    %c0_2 = arith.constant 0 : index
    %2 = vector.load %arg1[%c0_1, %c0_2] : memref<16x128xbf16, #tpu.memory_space<vmem>>, vector<16x128xbf16>
    %cst = arith.constant dense<0.000000e+00> : vector<16x128xf32>
    %3 = tpu.matmul %1, %2, %cst {dimension_numbers = #tpu.dot_dimension_numbers<[1], [0], [0], [1], [0, 0, 1, 1], [], []>} : vector<16x16xbf16>, vector<16x128xbf16>, vector<16x128xf32> -> vector<16x128xf32>
    %c0_3 = arith.constant 0 : index
    %c0_4 = arith.constant 0 : index
    %4 = vector.load %arg2[%c0_3, %c0_4] : memref<1x128xf32, #tpu.memory_space<vmem>>, vector<1x128xf32>
    %5 = vector.broadcast %4 : vector<1x128xf32> to vector<16x128xf32>
    %6 = arith.addf %3, %5 : vector<16x128xf32>
    %c0_5 = arith.constant 0 : index
    %c0_6 = arith.constant 0 : index
    %7 = vector.load %arg6[%c0_5, %c0_6] : memref<16x128xf32, #tpu.memory_space<vmem>>, vector<16x128xf32>
    tpu.vector_store %arg6[%c0_5, %c0_6], %6 {strides = array<i32>} : memref<16x128xf32, #tpu.memory_space<vmem>>, vector<16x128xf32>,
    %c0_7 = arith.constant 0 : index
    %c0_8 = arith.constant 0 : index
    %8 = vector.load %arg3[%c0_7, %c0_8] : memref<32x128xf32, #tpu.memory_space<vmem>>, vector<32x128xf32>
    %cst_9 = arith.constant 0.000000e+00 : f32
    %9 = vector.broadcast %cst_9 : f32 to vector<2x16xf32>
    %c0_i32 = arith.constant 0 : i32
    %c8_i32 = arith.constant 8 : i32
    %10 = arith.addi %c0_i32, %c8_i32 : i32
    %c1_i32 = arith.constant 1 : i32
    %11:4 = scf.for %arg7 = %c0_i32 to %10 step %c1_i32 iter_args(%arg8 = %9, %arg9 = %9, %arg10 = %9, %arg11 = %9) -> (vector<2x16xf32>, vector<2x16xf32>, vector<2x16xf32>, vector<2x16xf32>)  : i32 {
      %c7_i32 = arith.constant 7 : i32
      %12 = arith.subi %c7_i32, %arg7 : i32
      %c2_i32 = arith.constant 2 : i32
      %13 = arith.muli %arg7, %c2_i32 : i32
      %14 = tpu.assume_multiple %13, 2 : i32
      %c2_i32_11 = arith.constant 2 : i32
      %15 = arith.muli %12, %c2_i32_11 : i32
      %16 = tpu.assume_multiple %15, 2 : i32
      %17 = tpu.concatenate %arg8, %arg10 in 1 : vector<2x16xf32>, vector<2x16xf32> -> vector<2x32xf32>
      %cst_12 = arith.constant dense<0.000000e+00> : vector<2x128xf32>
      %18 = tpu.matmul %17, %8, %cst_12 {dimension_numbers = #tpu.dot_dimension_numbers<[1], [0], [0], [1], [0, 0, 1, 1], [], []>} : vector<2x32xf32>, vector<32x128xf32>, vector<2x128xf32> -> vector<2x128xf32>
      %19 = arith.index_cast %14 : i32 to index
      %c0_13 = arith.constant 0 : index
      %20 = vector.load %arg6[%19, %c0_13] : memref<16x128xf32, #tpu.memory_space<vmem>>, vector<2x64xf32>
      %21 = vector.extract_strided_slice %18 {offsets = [0, 0], sizes = [2, 64], strides = [1, 1]} : vector<2x128xf32> to vector<2x64xf32>
      %22 = arith.addf %20, %21 : vector<2x64xf32>
      %23 = arith.index_cast %16 : i32 to index
      %c64 = arith.constant 64 : index
      %24 = vector.load %arg6[%23, %c64] : memref<16x128xf32, #tpu.memory_space<vmem>>, vector<2x64xf32>
      %25 = vector.extract_strided_slice %18 {offsets = [0, 64], sizes = [2, 64], strides = [1, 1]} : vector<2x128xf32> to vector<2x64xf32>
      %26 = arith.addf %24, %25 : vector<2x64xf32>
      %27 = vector.extract_strided_slice %22 {offsets = [0, 0], sizes = [2, 48], strides = [1, 1]} : vector<2x64xf32> to vector<2x48xf32>
      %28 = arith.negf %27 : vector<2x48xf32>
      %29 = math.exp %28 : vector<2x48xf32>
      %cst_14 = arith.constant 1.000000e+00 : f32
      %30 = vector.broadcast %cst_14 : f32 to vector<2x48xf32>
      %31 = arith.addf %30, %29 : vector<2x48xf32>
      %32 = arith.divf %30, %31 : vector<2x48xf32>
      %33 = vector.extract_strided_slice %22 {offsets = [0, 48], sizes = [2, 16], strides = [1, 1]} : vector<2x64xf32> to vector<2x16xf32>
      %34 = math.tanh %33 : vector<2x16xf32>
      %35 = vector.extract_strided_slice %32 {offsets = [0, 0], sizes = [2, 16], strides = [1, 1]} : vector<2x48xf32> to vector<2x16xf32>
      %36 = vector.extract_strided_slice %32 {offsets = [0, 16], sizes = [2, 16], strides = [1, 1]} : vector<2x48xf32> to vector<2x16xf32>
      %37 = vector.extract_strided_slice %32 {offsets = [0, 32], sizes = [2, 16], strides = [1, 1]} : vector<2x48xf32> to vector<2x16xf32>
      %38 = arith.mulf %36, %arg9 : vector<2x16xf32>
      %39 = arith.mulf %35, %34 : vector<2x16xf32>
      %40 = arith.addf %38, %39 : vector<2x16xf32>
      %41 = math.tanh %40 : vector<2x16xf32>
      %42 = arith.mulf %37, %41 : vector<2x16xf32>
      %43 = vector.extract_strided_slice %26 {offsets = [0, 0], sizes = [2, 48], strides = [1, 1]} : vector<2x64xf32> to vector<2x48xf32>
      %44 = arith.negf %43 : vector<2x48xf32>
      %45 = math.exp %44 : vector<2x48xf32>
      %cst_15 = arith.constant 1.000000e+00 : f32
      %46 = vector.broadcast %cst_15 : f32 to vector<2x48xf32>
      %47 = arith.addf %46, %45 : vector<2x48xf32>
      %48 = arith.divf %46, %47 : vector<2x48xf32>
      %49 = vector.extract_strided_slice %26 {offsets = [0, 48], sizes = [2, 16], strides = [1, 1]} : vector<2x64xf32> to vector<2x16xf32>
      %50 = math.tanh %49 : vector<2x16xf32>
      %51 = vector.extract_strided_slice %48 {offsets = [0, 0], sizes = [2, 16], strides = [1, 1]} : vector<2x48xf32> to vector<2x16xf32>
      %52 = vector.extract_strided_slice %48 {offsets = [0, 16], sizes = [2, 16], strides = [1, 1]} : vector<2x48xf32> to vector<2x16xf32>
      %53 = vector.extract_strided_slice %48 {offsets = [0, 32], sizes = [2, 16], strides = [1, 1]} : vector<2x48xf32> to vector<2x16xf32>
      %54 = arith.mulf %52, %arg11 : vector<2x16xf32>
      %55 = arith.mulf %51, %50 : vector<2x16xf32>
      %56 = arith.addf %54, %55 : vector<2x16xf32>
      %57 = math.tanh %56 : vector<2x16xf32>
      %58 = arith.mulf %53, %57 : vector<2x16xf32>
      %59 = arith.index_cast %14 : i32 to index
      %c0_16 = arith.constant 0 : index
      %60 = vector.load %arg4[%59, %c0_16] : memref<16x16xf32, #tpu.memory_space<vmem>>, vector<2x16xf32>
      tpu.vector_store %arg4[%59, %c0_16], %42 {strides = array<i32>} : memref<16x16xf32, #tpu.memory_space<vmem>>, vector<2x16xf32>,
      %61 = arith.index_cast %16 : i32 to index
      %c0_17 = arith.constant 0 : index
      %62 = vector.load %arg5[%61, %c0_17] : memref<16x16xf32, #tpu.memory_space<vmem>>, vector<2x16xf32>
      tpu.vector_store %arg5[%61, %c0_17], %58 {strides = array<i32>} : memref<16x16xf32, #tpu.memory_space<vmem>>, vector<2x16xf32>,
      scf.yield %42, %40, %58, %56 : vector<2x16xf32>, vector<2x16xf32>, vector<2x16xf32>, vector<2x16xf32>
    }
    %c8_i32_10 = arith.constant 8 : i32
    return
  }
}

module attributes {stable_mosaic.version = 11 : i64} {
  func.func @kernel(%arg0: memref<16x16xf32, #tpu.memory_space<vmem>>, %arg1: memref<16x16xf32, #tpu.memory_space<vmem>>, %arg2: memref<32x128xbf16, #tpu.memory_space<vmem>>, %arg3: memref<1x128xf32, #tpu.memory_space<vmem>>, %arg4: memref<32x128xf32, #tpu.memory_space<vmem>>, %arg5: memref<16x16xf32, #tpu.memory_space<vmem>>, %arg6: memref<16x16xf32, #tpu.memory_space<vmem>>, %arg7: memref<16x128xf32, #tpu.memory_space<vmem>>) attributes {dimension_semantics = [], scalar_prefetch = 0 : i64, scratch_operands = 1 : i64, tpu.core_type = #tpu.core_type<tc>} {
    %c0 = arith.constant 0 : index
    %c0_0 = arith.constant 0 : index
    %0 = vector.load %arg0[%c0, %c0_0] : memref<16x16xf32, #tpu.memory_space<vmem>>, vector<16x16xf32>
    %1 = arith.truncf %0 : vector<16x16xf32> to vector<16x16xbf16>
    %c0_1 = arith.constant 0 : index
    %c0_2 = arith.constant 0 : index
    %2 = vector.load %arg2[%c0_1, %c0_2] : memref<32x128xbf16, #tpu.memory_space<vmem>>, vector<16x128xbf16>
    %cst = arith.constant dense<0.000000e+00> : vector<16x128xf32>
    %3 = tpu.matmul %1, %2, %cst {dimension_numbers = #tpu.dot_dimension_numbers<[1], [0], [0], [1], [0, 0, 1, 1], [], []>} : vector<16x16xbf16>, vector<16x128xbf16>, vector<16x128xf32> -> vector<16x128xf32>
    %c0_3 = arith.constant 0 : index
    %c0_4 = arith.constant 0 : index
    %4 = vector.load %arg1[%c0_3, %c0_4] : memref<16x16xf32, #tpu.memory_space<vmem>>, vector<16x16xf32>
    %5 = arith.truncf %4 : vector<16x16xf32> to vector<16x16xbf16>
    %c16 = arith.constant 16 : index
    %c0_5 = arith.constant 0 : index
    %6 = vector.load %arg2[%c16, %c0_5] : memref<32x128xbf16, #tpu.memory_space<vmem>>, vector<16x128xbf16>
    %cst_6 = arith.constant dense<0.000000e+00> : vector<16x128xf32>
    %7 = tpu.matmul %5, %6, %cst_6 {dimension_numbers = #tpu.dot_dimension_numbers<[1], [0], [0], [1], [0, 0, 1, 1], [], []>} : vector<16x16xbf16>, vector<16x128xbf16>, vector<16x128xf32> -> vector<16x128xf32>
    %8 = arith.addf %3, %7 : vector<16x128xf32>
    %c0_7 = arith.constant 0 : index
    %c0_8 = arith.constant 0 : index
    %9 = vector.load %arg3[%c0_7, %c0_8] : memref<1x128xf32, #tpu.memory_space<vmem>>, vector<1x128xf32>
    %10 = vector.broadcast %9 : vector<1x128xf32> to vector<16x128xf32>
    %11 = arith.addf %8, %10 : vector<16x128xf32>
    %c0_9 = arith.constant 0 : index
    %c0_10 = arith.constant 0 : index
    %12 = vector.load %arg7[%c0_9, %c0_10] : memref<16x128xf32, #tpu.memory_space<vmem>>, vector<16x128xf32>
    tpu.vector_store %arg7[%c0_9, %c0_10], %11 {strides = array<i32>} : memref<16x128xf32, #tpu.memory_space<vmem>>, vector<16x128xf32>,
    %c0_11 = arith.constant 0 : index
    %c0_12 = arith.constant 0 : index
    %13 = vector.load %arg4[%c0_11, %c0_12] : memref<32x128xf32, #tpu.memory_space<vmem>>, vector<32x128xf32>
    %cst_13 = arith.constant 0.000000e+00 : f32
    %14 = vector.broadcast %cst_13 : f32 to vector<2x16xf32>
    %c0_i32 = arith.constant 0 : i32
    %c8_i32 = arith.constant 8 : i32
    %15 = arith.addi %c0_i32, %c8_i32 : i32
    %c1_i32 = arith.constant 1 : i32
    %16:4 = scf.for %arg8 = %c0_i32 to %15 step %c1_i32 iter_args(%arg9 = %14, %arg10 = %14, %arg11 = %14, %arg12 = %14) -> (vector<2x16xf32>, vector<2x16xf32>, vector<2x16xf32>, vector<2x16xf32>)  : i32 {
      %c7_i32 = arith.constant 7 : i32
      %17 = arith.subi %c7_i32, %arg8 : i32
      %c2_i32 = arith.constant 2 : i32
      %18 = arith.muli %arg8, %c2_i32 : i32
      %19 = tpu.assume_multiple %18, 2 : i32
      %c2_i32_15 = arith.constant 2 : i32
      %20 = arith.muli %17, %c2_i32_15 : i32
      %21 = tpu.assume_multiple %20, 2 : i32
      %22 = tpu.concatenate %arg9, %arg11 in 1 : vector<2x16xf32>, vector<2x16xf32> -> vector<2x32xf32>
      %cst_16 = arith.constant dense<0.000000e+00> : vector<2x128xf32>
      %23 = tpu.matmul %22, %13, %cst_16 {dimension_numbers = #tpu.dot_dimension_numbers<[1], [0], [0], [1], [0, 0, 1, 1], [], []>} : vector<2x32xf32>, vector<32x128xf32>, vector<2x128xf32> -> vector<2x128xf32>
      %24 = arith.index_cast %19 : i32 to index
      %c0_17 = arith.constant 0 : index
      %25 = vector.load %arg7[%24, %c0_17] : memref<16x128xf32, #tpu.memory_space<vmem>>, vector<2x64xf32>
      %26 = vector.extract_strided_slice %23 {offsets = [0, 0], sizes = [2, 64], strides = [1, 1]} : vector<2x128xf32> to vector<2x64xf32>
      %27 = arith.addf %25, %26 : vector<2x64xf32>
      %28 = arith.index_cast %21 : i32 to index
      %c64 = arith.constant 64 : index
      %29 = vector.load %arg7[%28, %c64] : memref<16x128xf32, #tpu.memory_space<vmem>>, vector<2x64xf32>
      %30 = vector.extract_strided_slice %23 {offsets = [0, 64], sizes = [2, 64], strides = [1, 1]} : vector<2x128xf32> to vector<2x64xf32>
      %31 = arith.addf %29, %30 : vector<2x64xf32>
      %32 = vector.extract_strided_slice %27 {offsets = [0, 0], sizes = [2, 48], strides = [1, 1]} : vector<2x64xf32> to vector<2x48xf32>
      %33 = arith.negf %32 : vector<2x48xf32>
      %34 = math.exp %33 : vector<2x48xf32>
      %cst_18 = arith.constant 1.000000e+00 : f32
      %35 = vector.broadcast %cst_18 : f32 to vector<2x48xf32>
      %36 = arith.addf %35, %34 : vector<2x48xf32>
      %37 = arith.divf %35, %36 : vector<2x48xf32>
      %38 = vector.extract_strided_slice %27 {offsets = [0, 48], sizes = [2, 16], strides = [1, 1]} : vector<2x64xf32> to vector<2x16xf32>
      %39 = math.tanh %38 : vector<2x16xf32>
      %40 = vector.extract_strided_slice %37 {offsets = [0, 0], sizes = [2, 16], strides = [1, 1]} : vector<2x48xf32> to vector<2x16xf32>
      %41 = vector.extract_strided_slice %37 {offsets = [0, 16], sizes = [2, 16], strides = [1, 1]} : vector<2x48xf32> to vector<2x16xf32>
      %42 = vector.extract_strided_slice %37 {offsets = [0, 32], sizes = [2, 16], strides = [1, 1]} : vector<2x48xf32> to vector<2x16xf32>
      %43 = arith.mulf %41, %arg10 : vector<2x16xf32>
      %44 = arith.mulf %40, %39 : vector<2x16xf32>
      %45 = arith.addf %43, %44 : vector<2x16xf32>
      %46 = math.tanh %45 : vector<2x16xf32>
      %47 = arith.mulf %42, %46 : vector<2x16xf32>
      %48 = vector.extract_strided_slice %31 {offsets = [0, 0], sizes = [2, 48], strides = [1, 1]} : vector<2x64xf32> to vector<2x48xf32>
      %49 = arith.negf %48 : vector<2x48xf32>
      %50 = math.exp %49 : vector<2x48xf32>
      %cst_19 = arith.constant 1.000000e+00 : f32
      %51 = vector.broadcast %cst_19 : f32 to vector<2x48xf32>
      %52 = arith.addf %51, %50 : vector<2x48xf32>
      %53 = arith.divf %51, %52 : vector<2x48xf32>
      %54 = vector.extract_strided_slice %31 {offsets = [0, 48], sizes = [2, 16], strides = [1, 1]} : vector<2x64xf32> to vector<2x16xf32>
      %55 = math.tanh %54 : vector<2x16xf32>
      %56 = vector.extract_strided_slice %53 {offsets = [0, 0], sizes = [2, 16], strides = [1, 1]} : vector<2x48xf32> to vector<2x16xf32>
      %57 = vector.extract_strided_slice %53 {offsets = [0, 16], sizes = [2, 16], strides = [1, 1]} : vector<2x48xf32> to vector<2x16xf32>
      %58 = vector.extract_strided_slice %53 {offsets = [0, 32], sizes = [2, 16], strides = [1, 1]} : vector<2x48xf32> to vector<2x16xf32>
      %59 = arith.mulf %57, %arg12 : vector<2x16xf32>
      %60 = arith.mulf %56, %55 : vector<2x16xf32>
      %61 = arith.addf %59, %60 : vector<2x16xf32>
      %62 = math.tanh %61 : vector<2x16xf32>
      %63 = arith.mulf %58, %62 : vector<2x16xf32>
      %64 = arith.index_cast %19 : i32 to index
      %c0_20 = arith.constant 0 : index
      %65 = vector.load %arg5[%64, %c0_20] : memref<16x16xf32, #tpu.memory_space<vmem>>, vector<2x16xf32>
      tpu.vector_store %arg5[%64, %c0_20], %47 {strides = array<i32>} : memref<16x16xf32, #tpu.memory_space<vmem>>, vector<2x16xf32>,
      %66 = arith.index_cast %21 : i32 to index
      %c0_21 = arith.constant 0 : index
      %67 = vector.load %arg6[%66, %c0_21] : memref<16x16xf32, #tpu.memory_space<vmem>>, vector<2x16xf32>
      tpu.vector_store %arg6[%66, %c0_21], %63 {strides = array<i32>} : memref<16x16xf32, #tpu.memory_space<vmem>>, vector<2x16xf32>,
      scf.yield %47, %45, %63, %61 : vector<2x16xf32>, vector<2x16xf32>, vector<2x16xf32>, vector<2x16xf32>
    }
    %c8_i32_14 = arith.constant 8 : i32
    return
  }
}

module attributes {stable_mosaic.version = 11 : i64} {
  func.func @_dual_head_kernel(%arg0: i32, %arg1: memref<1x2x16xf32, #tpu.memory_space<vmem>>, %arg2: memref<1x2x16xf32, #tpu.memory_space<vmem>>, %arg3: memref<16x32xbf16, #tpu.memory_space<vmem>>, %arg4: memref<1x32xf32, #tpu.memory_space<vmem>>, %arg5: memref<16x32xbf16, #tpu.memory_space<vmem>>, %arg6: memref<1x32xf32, #tpu.memory_space<vmem>>, %arg7: memref<1x2x32xf32, #tpu.memory_space<vmem>>, %arg8: memref<1x2x32xf32, #tpu.memory_space<vmem>>) attributes {dimension_semantics = [#tpu.dimension_semantics<parallel>], iteration_bounds = array<i64: 8>, scalar_prefetch = 0 : i64, scratch_operands = 0 : i64, tpu.core_type = #tpu.core_type<tc>, window_params = [{transform_indices = @transform_0, window_bounds = array<i64: 1, 2, 16>}, {transform_indices = @transform_1, window_bounds = array<i64: 1, 2, 16>}, {pipeline_mode = #tpu.pipeline_mode<synchronous>, transform_indices = @transform_2, window_bounds = array<i64: 16, 32>}, {pipeline_mode = #tpu.pipeline_mode<synchronous>, transform_indices = @transform_3, window_bounds = array<i64: 1, 32>}, {pipeline_mode = #tpu.pipeline_mode<synchronous>, transform_indices = @transform_4, window_bounds = array<i64: 16, 32>}, {pipeline_mode = #tpu.pipeline_mode<synchronous>, transform_indices = @transform_5, window_bounds = array<i64: 1, 32>}, {transform_indices = @transform_6, window_bounds = array<i64: 1, 2, 32>}, {transform_indices = @transform_7, window_bounds = array<i64: 1, 2, 32>}]} {
    %c0 = arith.constant 0 : index
    %c0_0 = arith.constant 0 : index
    %c0_1 = arith.constant 0 : index
    %0 = vector.load %arg1[%c0, %c0_0, %c0_1] : memref<1x2x16xf32, #tpu.memory_space<vmem>>, vector<1x2x16xf32>
    %1 = vector.shape_cast %0 : vector<1x2x16xf32> to vector<2x16xf32>
    %2 = arith.truncf %1 : vector<2x16xf32> to vector<2x16xbf16>
    %c0_2 = arith.constant 0 : index
    %c0_3 = arith.constant 0 : index
    %c0_4 = arith.constant 0 : index
    %3 = vector.load %arg2[%c0_2, %c0_3, %c0_4] : memref<1x2x16xf32, #tpu.memory_space<vmem>>, vector<1x2x16xf32>
    %4 = vector.shape_cast %3 : vector<1x2x16xf32> to vector<2x16xf32>
    %5 = arith.truncf %4 : vector<2x16xf32> to vector<2x16xbf16>
    %c0_5 = arith.constant 0 : index
    %c0_6 = arith.constant 0 : index
    %6 = vector.load %arg3[%c0_5, %c0_6] : memref<16x32xbf16, #tpu.memory_space<vmem>>, vector<16x32xbf16>
    %cst = arith.constant dense<0.000000e+00> : vector<2x32xf32>
    %7 = tpu.matmul %2, %6, %cst {dimension_numbers = #tpu.dot_dimension_numbers<[1], [0], [0], [1], [0, 0, 1, 1], [], []>} : vector<2x16xbf16>, vector<16x32xbf16>, vector<2x32xf32> -> vector<2x32xf32>
    %c0_7 = arith.constant 0 : index
    %c0_8 = arith.constant 0 : index
    %8 = vector.load %arg4[%c0_7, %c0_8] : memref<1x32xf32, #tpu.memory_space<vmem>>, vector<1x32xf32>
    %9 = vector.broadcast %8 : vector<1x32xf32> to vector<2x32xf32>
    %10 = arith.addf %7, %9 : vector<2x32xf32>
    %c0_9 = arith.constant 0 : index
    %c0_10 = arith.constant 0 : index
    %c0_11 = arith.constant 0 : index
    %11 = vector.load %arg7[%c0_9, %c0_10, %c0_11] : memref<1x2x32xf32, #tpu.memory_space<vmem>>, vector<1x2x32xf32>
    %12 = vector.shape_cast %11 : vector<1x2x32xf32> to vector<2x32xf32>
    %13 = vector.shape_cast %10 : vector<2x32xf32> to vector<1x2x32xf32>
    tpu.vector_store %arg7[%c0_9, %c0_10, %c0_11], %13 {strides = array<i32>} : memref<1x2x32xf32, #tpu.memory_space<vmem>>, vector<1x2x32xf32>,
    %c0_12 = arith.constant 0 : index
    %c0_13 = arith.constant 0 : index
    %14 = vector.load %arg5[%c0_12, %c0_13] : memref<16x32xbf16, #tpu.memory_space<vmem>>, vector<16x32xbf16>
    %cst_14 = arith.constant dense<0.000000e+00> : vector<2x32xf32>
    %15 = tpu.matmul %5, %14, %cst_14 {dimension_numbers = #tpu.dot_dimension_numbers<[1], [0], [0], [1], [0, 0, 1, 1], [], []>} : vector<2x16xbf16>, vector<16x32xbf16>, vector<2x32xf32> -> vector<2x32xf32>
    %c0_15 = arith.constant 0 : index
    %c0_16 = arith.constant 0 : index
    %16 = vector.load %arg6[%c0_15, %c0_16] : memref<1x32xf32, #tpu.memory_space<vmem>>, vector<1x32xf32>
    %17 = vector.broadcast %16 : vector<1x32xf32> to vector<2x32xf32>
    %18 = arith.addf %15, %17 : vector<2x32xf32>
    %c0_17 = arith.constant 0 : index
    %c0_18 = arith.constant 0 : index
    %c0_19 = arith.constant 0 : index
    %19 = vector.load %arg8[%c0_17, %c0_18, %c0_19] : memref<1x2x32xf32, #tpu.memory_space<vmem>>, vector<1x2x32xf32>
    %20 = vector.shape_cast %19 : vector<1x2x32xf32> to vector<2x32xf32>
    %21 = vector.shape_cast %18 : vector<2x32xf32> to vector<1x2x32xf32>
    tpu.vector_store %arg8[%c0_17, %c0_18, %c0_19], %21 {strides = array<i32>} : memref<1x2x32xf32, #tpu.memory_space<vmem>>, vector<1x2x32xf32>,
    return
  }
  func.func @transform_0(%arg0: i32) -> (i32, i32, i32) {
    %c0_i32 = arith.constant 0 : i32
    %c0_i32_0 = arith.constant 0 : i32
    %c0_i32_1 = arith.constant 0 : i32
    return %arg0, %c0_i32, %c0_i32_0 : i32, i32, i32
  }
  func.func @transform_1(%arg0: i32) -> (i32, i32, i32) {
    %c0_i32 = arith.constant 0 : i32
    %c0_i32_0 = arith.constant 0 : i32
    %c0_i32_1 = arith.constant 0 : i32
    return %arg0, %c0_i32, %c0_i32_0 : i32, i32, i32
  }
  func.func @transform_2(%arg0: i32) -> (i32, i32) {
    %c0_i32 = arith.constant 0 : i32
    %c0_i32_0 = arith.constant 0 : i32
    %c0_i32_1 = arith.constant 0 : i32
    return %c0_i32, %c0_i32_0 : i32, i32
  }
  func.func @transform_3(%arg0: i32) -> (i32, i32) {
    %c0_i32 = arith.constant 0 : i32
    %c0_i32_0 = arith.constant 0 : i32
    %c0_i32_1 = arith.constant 0 : i32
    return %c0_i32, %c0_i32_0 : i32, i32
  }
  func.func @transform_4(%arg0: i32) -> (i32, i32) {
    %c0_i32 = arith.constant 0 : i32
    %c0_i32_0 = arith.constant 0 : i32
    %c0_i32_1 = arith.constant 0 : i32
    return %c0_i32, %c0_i32_0 : i32, i32
  }
  func.func @transform_5(%arg0: i32) -> (i32, i32) {
    %c0_i32 = arith.constant 0 : i32
    %c0_i32_0 = arith.constant 0 : i32
    %c0_i32_1 = arith.constant 0 : i32
    return %c0_i32, %c0_i32_0 : i32, i32
  }
  func.func @transform_6(%arg0: i32) -> (i32, i32, i32) {
    %c0_i32 = arith.constant 0 : i32
    %c0_i32_0 = arith.constant 0 : i32
    %c0_i32_1 = arith.constant 0 : i32
    return %arg0, %c0_i32, %c0_i32_0 : i32, i32, i32
  }
  func.func @transform_7(%arg0: i32) -> (i32, i32, i32) {
    %c0_i32 = arith.constant 0 : i32
    %c0_i32_0 = arith.constant 0 : i32
    %c0_i32_1 = arith.constant 0 : i32
    return %arg0, %c0_i32, %c0_i32_0 : i32, i32, i32
  }
}

</mosaic_0001>

<llo_original>
// kernel: elmo_forward.4
$region0: #{elmo_forward.4}
  #allocation0 [shape = 'u32[]', space=smem, size = 0x4, offset = 0x4, fixed_abs, tag = 'smem constant byte address 0x4 - core index']
  #allocation1 [shape = 'u32[144,128]{1,0:T(1,128)}', space=vmem, size = 0x12000, scoped, tag = 'internal scratch']
  #allocation2 [shape = 's32[16]{0}', space=sflag, size = 0x40, scoped, tag = 'scratch operand']
  #allocation5 [shape = 's32[]', space=sflag, size = 0x4, offset = 0, fixed_abs, tag = 'sflag constant byte address 0x0 - dummy sync flag']
  %s0 = inlined_call_operand.vmem [shape: s32[16], index: 0, kind: input, shape index: {}]
  %s1 = inlined_call_operand.vmem [shape: f32[32,16], index: 1, kind: input, shape index: {}]
  %s2 = inlined_call_operand.vmem [shape: f32[16,16], index: 2, kind: output, shape index: {}]
  %s3 = sld [smem:[#allocation0]]
  $region62: #{elmo_forward.4} parent=0
    _
  %s5 = ssub.s32 1, %s3
  %s6 = scalar_select 0, %s5, %s3
  $region1: #{elmo_forward.4} parent=0
    #allocation3 [shape = 'u8[512]{0}', space=smem, size = 0x200, scoped, tag = 'input window, operand 0, single buffered']
    #allocation4 [shape = 's32[1]{0}', space=sflag, size = 0x4, scoped, tag = 'scoped memory for elmo_forward.4']
    %7 = vsyncpa [#allocation4], 0
    // Predicated region
    $region2: #{elmo_forward.4} parent=1 // pred_check
      _
    $region3: #{elmo_forward.4} parent=1 // pred_check_branch
      %9 = sbr.rel (0) target = $region5
    $region4: #{elmo_forward.4} parent=1 // pred_region
      %s11 = ssub.s32 16, 16
      %12 = vsyncadd [#allocation4], %s11
      %s14 = sshll.u32 %s0, 4
      %s15 = int_to_ptr.vmem [resolvable:$true] %s14
      %17 = dma.vmem_to_smem %s15, 16, [#allocation3], [#allocation4]
    $region5: #{elmo_forward.4} parent=1 // pred_fallthru
      _
    // Predicated region
    $region6: #{elmo_forward.4} parent=1 // pred_check
      _
    $region7: #{elmo_forward.4} parent=1 // pred_check_branch
      %19 = sbr.rel (0) target = $region9
    $region8: #{elmo_forward.4} parent=1 // pred_region
      %20 = dma.done [#allocation4], 16
    $region9: #{elmo_forward.4} parent=1 // pred_fallthru
      _
    %21 = sfence
    loop: start=0, step=1, limit=16
    $region10: #{elmo_forward.4} parent=1 // loop_pre_header
      _
    $region11: #{elmo_forward.4} parent=1 // loop_header
      %s23 = sphi 0, %s27
      %p24 = scmp.ge.s32.totalorder %s23, 16
    $region12: #{elmo_forward.4} parent=1 // loop_header_branch
      %26 = sbr.rel (%p24) target = $region16
    $region13: #{elmo_forward.4} parent=1 // loop_body
      %s28 = sld [smem:[#allocation3 + %s23]]
      %p29 = scmp.gt.s32.totalorder %s28, 0
      %s30 = scalar_select %p29, %s28, 0
      %p31 = scmp.lt.s32.totalorder %s30, 31
      %s32 = scalar_select %p31, %s30, 31
      %s33 = scalar_lea.vmem %s1, %s32
      %s34 = scalar_lea.vmem %s2, %s23
      %s35 = scalar_lea.sflag [#allocation2], %s23
      %p37 = scmp.lt.u32.totalorder 1, 8
      %p38 = pneg %p37
      // Predicated region
      $region17: #{elmo_forward.4} parent=13 // pred_check
        _
      $region18: #{elmo_forward.4} parent=13 // pred_check_branch
        %40 = sbr.rel (%p37) target = $region20
      $region19: #{elmo_forward.4} parent=13 // pred_region
        %s56 = sand.u32 1, 7
        %p57 = scmp.eq.s32.totalorder %s56, 0
        %p58 = pneg %p57
        // Predicated region
        $region32: #{elmo_forward.4} parent=19 // pred_check
          _
        $region33: #{elmo_forward.4} parent=19 // pred_check_branch
          %60 = sbr.rel (%p57) target = $region35
        $region34: #{elmo_forward.4} parent=19 // pred_region
          %s61 = sand.u32 1, 7
          %s62 = ssub.s32 1, %s61
          %s63 = scalar_lea.vmem %s33, %s62
          %s64 = ssub.s32 1, %s61
          %s65 = scalar_lea.vmem %s34, %s64
          %s66 = sshll.u32 1, %s61
          %s67 = ssub.s32 %s66, 1
          loop: start=0, step=1, limit=1
          $region36: #{elmo_forward.4} parent=34 // loop_pre_header
            _
          $region37: #{elmo_forward.4} parent=34 // loop_header
            %s69 = sphi 0, %s73
            %p70 = scmp.ge.s32.totalorder %s69, 1
            %s74 = sphi %s63, %s63
            %s75 = sphi %s65, %s65
          $region38: #{elmo_forward.4} parent=34 // loop_header_branch
            %72 = sbr.rel (%p70) target = $region42
          $region39: #{elmo_forward.4} parent=34 // loop_body
            %v76 = vld [vmem:[%s74] sm:%s67]
            %77 = vst [vmem:[%s75] sm:%s67] %v76
          $region40: #{elmo_forward.4} parent=34 // loop_footer
            %s73 = sadd.s32 1, %s69
          $region41: #{elmo_forward.4} parent=34 // loop_footer_branch
            %68 = sbr.rel target = $region37
          $region42: #{elmo_forward.4} parent=34 // loop_exit
            _
        $region35: #{elmo_forward.4} parent=19 // pred_fallthru
          _
      $region20: #{elmo_forward.4} parent=13 // pred_fallthru
        _
      // Predicated region
      $region21: #{elmo_forward.4} parent=13 // pred_check
        %p41 = pneg %p37
      $region22: #{elmo_forward.4} parent=13 // pred_check_branch
        %43 = sbr.rel (%p41) target = $region24
      $region23: #{elmo_forward.4} parent=13 // pred_region
        %s44 = sshll.u32 1, 1
        %s45 = ssub.s32 %s44, 1
        loop: start=0, step=1, limit=1
        $region25: #{elmo_forward.4} parent=23 // loop_pre_header
          _
        $region26: #{elmo_forward.4} parent=23 // loop_header
          %s47 = sphi 0, %s51
          %p48 = scmp.ge.s32.totalorder %s47, 1
          %s52 = sphi %s33, %s33
          %s53 = sphi %s34, %s34
        $region27: #{elmo_forward.4} parent=23 // loop_header_branch
          %50 = sbr.rel (%p48) target = $region31
        $region28: #{elmo_forward.4} parent=23 // loop_body
          %v54 = vld [vmem:[%s52] sm:%s45]
          %55 = vst [vmem:[%s53] sm:%s45] %v54
        $region29: #{elmo_forward.4} parent=23 // loop_footer
          %s51 = sadd.s32 1, %s47
        $region30: #{elmo_forward.4} parent=23 // loop_footer_branch
          %46 = sbr.rel target = $region26
        $region31: #{elmo_forward.4} parent=23 // loop_exit
          _
      $region24: #{elmo_forward.4} parent=13 // pred_fallthru
        _
      // Predicated region
      $region43: #{elmo_forward.4} parent=13 // pred_check
        _
      $region44: #{elmo_forward.4} parent=13 // pred_check_branch
        %80 = sbr.rel (0) target = $region46
      $region45: #{elmo_forward.4} parent=13 // pred_region
        %81 = vsyncadd %s35, 16
      $region46: #{elmo_forward.4} parent=13 // pred_fallthru
        _
    $region14: #{elmo_forward.4} parent=1 // loop_footer
      %s27 = sadd.s32 1, %s23
    $region15: #{elmo_forward.4} parent=1 // loop_footer_branch
      %22 = sbr.rel target = $region11
    $region16: #{elmo_forward.4} parent=1 // loop_exit
      _
    loop: start=0, step=1, limit=16
    $region47: #{elmo_forward.4} parent=1 // loop_pre_header
      _
    $region48: #{elmo_forward.4} parent=1 // loop_header
      %s83 = sphi 0, %s87
      %p84 = scmp.ge.s32.totalorder %s83, 16
    $region49: #{elmo_forward.4} parent=1 // loop_header_branch
      %86 = sbr.rel (%p84) target = $region53
    $region50: #{elmo_forward.4} parent=1 // loop_body
      %s88 = scalar_lea.sflag [#allocation2], %s83
      %s89 = smul.u32 1, 1
      %s90 = sshll.u32 %s89, 4
      %91 = dma.done %s88, %s90
    $region51: #{elmo_forward.4} parent=1 // loop_footer
      %s87 = sadd.s32 1, %s83
    $region52: #{elmo_forward.4} parent=1 // loop_footer_branch
      %82 = sbr.rel target = $region48
    $region53: #{elmo_forward.4} parent=1 // loop_exit
      _
    // Predicated region
    $region54: #{elmo_forward.4} parent=1 // pred_check
      _
    $region55: #{elmo_forward.4} parent=1 // pred_check_branch
      %93 = sbr.rel (0) target = $region57
    $region56: #{elmo_forward.4} parent=1 // pred_region
      _
    $region57: #{elmo_forward.4} parent=1 // pred_fallthru
      _
    // Predicated region
    $region58: #{elmo_forward.4} parent=1 // pred_check
      _
    $region59: #{elmo_forward.4} parent=1 // pred_check_branch
      %95 = sbr.rel (0) target = $region61
    $region60: #{elmo_forward.4} parent=1 // pred_region
      _
    $region61: #{elmo_forward.4} parent=1 // pred_fallthru
      _
    %96 = vsyncpa [#allocation4], 1
  %97 = vsyncmov [#allocation2]
  %s98 = vpop.sfrf %97
  %p99 = scmp.eq.s32.totalorder %s98, 0
  %p100 = pneg %p99
  %102 = shalt.err (%p100)
  %s103 = scalar_lea.sflag [#allocation2], 1
  %104 = vsyncmov %s103
  %s105 = vpop.sfrf %104
  %p106 = scmp.eq.s32.totalorder %s105, 0
  %p107 = pneg %p106
  %109 = shalt.err (%p107)
  %s110 = scalar_lea.sflag [#allocation2], 2
  %111 = vsyncmov %s110
  %s112 = vpop.sfrf %111
  %p113 = scmp.eq.s32.totalorder %s112, 0
  %p114 = pneg %p113
  %116 = shalt.err (%p114)
  %s117 = scalar_lea.sflag [#allocation2], 3
  %118 = vsyncmov %s117
  %s119 = vpop.sfrf %118
  %p120 = scmp.eq.s32.totalorder %s119, 0
  %p121 = pneg %p120
  %123 = shalt.err (%p121)
  %s124 = scalar_lea.sflag [#allocation2], 4
  %125 = vsyncmov %s124
  %s126 = vpop.sfrf %125
  %p127 = scmp.eq.s32.totalorder %s126, 0
  %p128 = pneg %p127
  %130 = shalt.err (%p128)
  %s131 = scalar_lea.sflag [#allocation2], 5
  %132 = vsyncmov %s131
  %s133 = vpop.sfrf %132
  %p134 = scmp.eq.s32.totalorder %s133, 0
  %p135 = pneg %p134
  %137 = shalt.err (%p135)
  %s138 = scalar_lea.sflag [#allocation2], 6
  %139 = vsyncmov %s138
  %s140 = vpop.sfrf %139
  %p141 = scmp.eq.s32.totalorder %s140, 0
  %p142 = pneg %p141
  %144 = shalt.err (%p142)
  %s145 = scalar_lea.sflag [#allocation2], 7
  %146 = vsyncmov %s145
  %s147 = vpop.sfrf %146
  %p148 = scmp.eq.s32.totalorder %s147, 0
  %p149 = pneg %p148
  %151 = shalt.err (%p149)
  %s152 = scalar_lea.sflag [#allocation2], 8
  %153 = vsyncmov %s152
  %s154 = vpop.sfrf %153
  %p155 = scmp.eq.s32.totalorder %s154, 0
  %p156 = pneg %p155
  %158 = shalt.err (%p156)
  %s159 = scalar_lea.sflag [#allocation2], 9
  %160 = vsyncmov %s159
  %s161 = vpop.sfrf %160
  %p162 = scmp.eq.s32.totalorder %s161, 0
  %p163 = pneg %p162
  %165 = shalt.err (%p163)
  %s166 = scalar_lea.sflag [#allocation2], 10
  %167 = vsyncmov %s166
  %s168 = vpop.sfrf %167
  %p169 = scmp.eq.s32.totalorder %s168, 0
  %p170 = pneg %p169
  %172 = shalt.err (%p170)
  %s173 = scalar_lea.sflag [#allocation2], 11
  %174 = vsyncmov %s173
  %s175 = vpop.sfrf %174
  %p176 = scmp.eq.s32.totalorder %s175, 0
  %p177 = pneg %p176
  %179 = shalt.err (%p177)
  %s180 = scalar_lea.sflag [#allocation2], 12
  %181 = vsyncmov %s180
  %s182 = vpop.sfrf %181
  %p183 = scmp.eq.s32.totalorder %s182, 0
  %p184 = pneg %p183
  %186 = shalt.err (%p184)
  %s187 = scalar_lea.sflag [#allocation2], 13
  %188 = vsyncmov %s187
  %s189 = vpop.sfrf %188
  %p190 = scmp.eq.s32.totalorder %s189, 0
  %p191 = pneg %p190
  %193 = shalt.err (%p191)
  %s194 = scalar_lea.sflag [#allocation2], 14
  %195 = vsyncmov %s194
  %s196 = vpop.sfrf %195
  %p197 = scmp.eq.s32.totalorder %s196, 0
  %p198 = pneg %p197
  %200 = shalt.err (%p198)
  %s201 = scalar_lea.sflag [#allocation2], 15
  %202 = vsyncmov %s201
  %s203 = vpop.sfrf %202
  %p204 = scmp.eq.s32.totalorder %s203, 0
  %p205 = pneg %p204
  %207 = shalt.err (%p205)

// kernel: elmo_forward.5
$region0: #{elmo_forward.5}
  #allocation0 [shape = 'u32[]', space=smem, size = 0x4, offset = 0x4, fixed_abs, tag = 'smem constant byte address 0x4 - core index']
  #allocation1 [shape = 'u32[144,128]{1,0:T(1,128)}', space=vmem, size = 0x12000, scoped, tag = 'internal scratch']
  #allocation2 [shape = 'f32[16,128]{1,0:T(8,128)}', space=vmem, size = 0x2000, scoped, tag = 'scratch operand']
  %s0 = inlined_call_operand.vmem [shape: f32[16,16], index: 0, kind: input, shape index: {}]
  %s1 = inlined_call_operand.vmem [shape: bf16[16,128], index: 1, kind: input, shape index: {}]
  %s2 = inlined_call_operand.vmem [shape: f32[1,128], index: 2, kind: input, shape index: {}]
  %s3 = inlined_call_operand.vmem [shape: f32[32,128], index: 3, kind: input, shape index: {}]
  %s4 = inlined_call_operand.vmem [shape: f32[16,16], index: 4, kind: output, shape index: {0}]
  %s5 = inlined_call_operand.vmem [shape: f32[16,16], index: 5, kind: output, shape index: {1}]
  %6 = xla_tuple %s4, %s5
  %s7 = sld [smem:[#allocation0]]
  $region41: #{elmo_forward.5} parent=0
    _
  %s9 = ssub.s32 1, %s7
  %s10 = scalar_select 0, %s9, %s7
  // Predicated region
  $region2: #{elmo_forward.5} parent=0 // pred_check
    _
  $region3: #{elmo_forward.5} parent=0 // pred_check_branch
    %12 = sbr.rel (0) target = $region5
  $region4: #{elmo_forward.5} parent=0 // pred_region
    _
  $region5: #{elmo_forward.5} parent=0 // pred_fallthru
    _
  // Predicated region
  $region6: #{elmo_forward.5} parent=0 // pred_check
    _
  $region7: #{elmo_forward.5} parent=0 // pred_check_branch
    %14 = sbr.rel (0) target = $region9
  $region8: #{elmo_forward.5} parent=0 // pred_region
    _
  $region9: #{elmo_forward.5} parent=0 // pred_fallthru
    _
  // Predicated region
  $region10: #{elmo_forward.5} parent=0 // pred_check
    _
  $region11: #{elmo_forward.5} parent=0 // pred_check_branch
    %16 = sbr.rel (0) target = $region13
  $region12: #{elmo_forward.5} parent=0 // pred_region
    _
  $region13: #{elmo_forward.5} parent=0 // pred_fallthru
    _
  // Predicated region
  $region14: #{elmo_forward.5} parent=0 // pred_check
    _
  $region15: #{elmo_forward.5} parent=0 // pred_check_branch
    %18 = sbr.rel (0) target = $region17
  $region16: #{elmo_forward.5} parent=0 // pred_region
    _
  $region17: #{elmo_forward.5} parent=0 // pred_fallthru
    _
  %v20 = vld [vmem:[%s0] sm:$0xff]
  %v21 = vld [vmem:[%s0 + $0x8] sm:$0xff]
  %v22 = vpack.c.bf16 %v21, %v20
  %v23 = vld [vmem:[%s1] sm:$0xf]
  %v24 = vld [vmem:[%s1 + $0x4] sm:$0xf]
  %v25 = vld [vmem:[%s2] sm:$0x1]
  %v27 = vlaneseq
  %v28 = vshrl.u32 %v27, 7
  %v29 = vsub.s32 0, %v28
  %v30 = vrot.slane %v25, %v29
  %v34 = vunpack.c.l.b16 %v23
  %v35 = vunpack.c.l.b16 %v24
  %v36 = vpack.c.b16 %v35, %v34
  %vm38 = vcmask 130048
  %v40 = vsel %vm38, %v22, 0
  %42 = vmatprep.subr.bf16.mxu0 0
  %43 = vmatpush1.bf16.msra.mxu0 0
  %44 = vmatprep.subr.bf16.mxu0 0
  %45 = vmatpush1.bf16.msra.mxu0 0
  %46 = vmatprep.subr.bf16.mxu0 0
  %47 = vmatpush1.bf16.msra.mxu0 0
  %48 = vmatprep.subr.bf16.mxu0 0
  %49 = vmatpush1.bf16.msra.mxu0 0
  %50 = vmatprep.subr.bf16.mxu0 0
  %51 = vmatpush1.bf16.msra.mxu0 0
  %52 = vmatprep.subr.bf16.mxu0 0
  %53 = vmatpush1.bf16.msra.mxu0 0
  %54 = vmatprep.subr.bf16.mxu0 0
  %55 = vmatpush1.bf16.msra.mxu0 0
  %56 = vmatprep.subr.bf16.mxu0 0
  %57 = vmatpush1.bf16.msra.mxu0 %v36
  %58 = vmatprep.subr.bf16.mxu0 0
  %59 = vmatpush2.bf16.msra.mxu0 0
  %60 = vmatprep.subr.bf16.mxu0 0
  %61 = vmatpush2.bf16.msra.mxu0 0
  %62 = vmatprep.subr.bf16.mxu0 0
  %63 = vmatpush2.bf16.msra.mxu0 0
  %64 = vmatprep.subr.bf16.mxu0 0
  %65 = vmatpush2.bf16.msra.mxu0 0
  %66 = vmatprep.subr.bf16.mxu0 0
  %67 = vmatpush2.bf16.msra.mxu0 0
  %68 = vmatprep.subr.bf16.mxu0 0
  %69 = vmatpush2.bf16.msra.mxu0 0
  %70 = vmatprep.subr.bf16.mxu0 0
  %71 = vmatpush2.bf16.msra.mxu0 0
  %72 = vmatprep.subr.bf16.mxu0 0
  %73 = vmatpush2.bf16.msra.mxu0 0
  %74 = vmatprep.mubr.bf16.mxu0 0
  %75 = vmatmul.mubr.bf16.gmra.mxu0 %v40
  %v76 = vpop.f32.mrf.mxu0
  %v77 = vadd.f32 %v30, %v76
  %v78 = vpop.f32.mrf.mxu0
  %v79 = vpop.f32.mrf.mxu0
  %v80 = vadd.f32 %v30, %v79
  %v81 = vpop.f32.mrf.mxu0
  %82 = vdwg.mxu0
  %83 = vst [vmem:[#allocation2] sm:$0xff] %v77
  %84 = vst [vmem:[#allocation2 + $0x8] sm:$0xff] %v80
  %v85 = vld [vmem:[%s3] sm:$0xff]
  %v86 = vld [vmem:[%s3 + $0x8] sm:$0xff]
  %v87 = vld [vmem:[%s3 + $0x10] sm:$0xff]
  %v88 = vld [vmem:[%s3 + $0x18] sm:$0xff]
  loop: start=0, step=1, limit=8
  $region18: #{elmo_forward.5} parent=0 // loop_pre_header
    _
  $region19: #{elmo_forward.5} parent=0 // loop_header
    %s90 = sphi 0, %s94
    %p91 = scmp.ge.s32.totalorder %s90, 8
    %v95 = vphi 0.0, %v214
    %v96 = vphi 0.0, %v208
    %v97 = vphi 0.0, %v238
    %v98 = vphi 0.0, %v232
  $region20: #{elmo_forward.5} parent=0 // loop_header_branch
    %93 = sbr.rel (%p91) target = $region24
  $region21: #{elmo_forward.5} parent=0 // loop_body
    %s99 = ssub.s32 7, %s90
    %s100 = smul.u32 %s90, 2
    %s101 = smul.u32 %s99, 2
    %103 = vrot.lane.b32.xlu0 %v95, 96
    %v104 = vpop.permute.xlu0 %103
    %107 = vrot.lane.b32.xlu0 %v97, 48
    %v108 = vpop.permute.xlu0 %107
    %v110 = vsel %vm38, %v104, %v108
    %vm111 = vcmask 261120
    %v113 = vsel %vm111, %v110, 0
    %115 = vmatprep.subr.mxu0 0.0
    %116 = vmatpush1.msra.mxu0 0.0
    %117 = vmatprep.subr.mxu0 0.0
    %118 = vmatpush1.msra.mxu0 0.0
    %119 = vmatprep.subr.mxu0 0.0
    %120 = vmatpush1.msra.mxu0 0.0
    %121 = vmatprep.subr.mxu0 0.0
    %122 = vmatpush1.msra.mxu0 0.0
    %123 = vmatprep.subr.mxu0 0.0
    %124 = vmatpush1.msra.mxu0 0.0
    %125 = vmatprep.subr.mxu0 0.0
    %126 = vmatpush1.msra.mxu0 0.0
    %127 = vmatprep.subr.mxu0 0.0
    %128 = vmatpush1.msra.mxu0 0.0
    %129 = vmatprep.subr.mxu0 0.0
    %130 = vmatpush1.msra.mxu0 0.0
    %131 = vmatprep.subr.mxu0 0.0
    %132 = vmatpush1.msra.mxu0 0.0
    %133 = vmatprep.subr.mxu0 0.0
    %134 = vmatpush1.msra.mxu0 0.0
    %135 = vmatprep.subr.mxu0 0.0
    %136 = vmatpush1.msra.mxu0 0.0
    %137 = vmatprep.subr.mxu0 0.0
    %138 = vmatpush1.msra.mxu0 0.0
    %139 = vmatprep.subr.mxu0 0.0
    %140 = vmatpush1.msra.mxu0 %v88
    %141 = vmatprep.subr.mxu0 0.0
    %142 = vmatpush1.msra.mxu0 %v87
    %143 = vmatprep.subr.mxu0 0.0
    %144 = vmatpush1.msra.mxu0 %v86
    %145 = vmatprep.subr.mxu0 0.0
    %146 = vmatpush1.msra.mxu0 %v85
    %147 = vmatprep.subr.mxu0 0.0
    %148 = vmatpush2.msra.mxu0 0.0
    %149 = vmatprep.subr.mxu0 0.0
    %150 = vmatpush2.msra.mxu0 0.0
    %151 = vmatprep.subr.mxu0 0.0
    %152 = vmatpush2.msra.mxu0 0.0
    %153 = vmatprep.subr.mxu0 0.0
    %154 = vmatpush2.msra.mxu0 0.0
    %155 = vmatprep.subr.mxu0 0.0
    %156 = vmatpush2.msra.mxu0 0.0
    %157 = vmatprep.subr.mxu0 0.0
    %158 = vmatpush2.msra.mxu0 0.0
    %159 = vmatprep.subr.mxu0 0.0
    %160 = vmatpush2.msra.mxu0 0.0
    %161 = vmatprep.subr.mxu0 0.0
    %162 = vmatpush2.msra.mxu0 0.0
    %163 = vmatprep.subr.mxu0 0.0
    %164 = vmatpush2.msra.mxu0 0.0
    %165 = vmatprep.subr.mxu0 0.0
    %166 = vmatpush2.msra.mxu0 0.0
    %167 = vmatprep.subr.mxu0 0.0
    %168 = vmatpush2.msra.mxu0 0.0
    %169 = vmatprep.subr.mxu0 0.0
    %170 = vmatpush2.msra.mxu0 0.0
    %171 = vmatprep.subr.mxu0 0.0
    %172 = vmatpush2.msra.mxu0 0.0
    %173 = vmatprep.subr.mxu0 0.0
    %174 = vmatpush2.msra.mxu0 0.0
    %175 = vmatprep.subr.mxu0 0.0
    %176 = vmatpush2.msra.mxu0 0.0
    %177 = vmatprep.subr.mxu0 0.0
    %178 = vmatpush2.msra.mxu0 0.0
    %179 = vmatprep.mubr.f32.mxu0 0.0
    %180 = vmatmul.mubr.f32.gmra.mxu0 %v113
    %v181 = vpop.f32.mrf.mxu0
    %v182 = vadd.f32 0.0, %v181
    %v183 = vpop.f32.mrf.mxu0
    %184 = vdwg.mxu0
    %s185 = scalar_lea.vmem [#allocation2], %s100
    %v186 = vld [vmem:[%s185] sm:$0x3]
    %v187 = vadd.f32 %v186, %v182
    %s188 = scalar_lea.vmem [#allocation2], %s101
    %v189 = vld [vmem:[%s188] sm:$0x3]
    %v190 = vadd.f32 %v189, %v182
    %v191 = vxor.u32 %v187, 2147483648
    %v192 = vmul.f32 %v191, 1.442695
    %v193 = vpow.pop %v192
    %v194 = vadd.f32 %v193, 1.0
    %v195 = vrcp.pop %v194
    %v196 = vmul.f32 1.0, %v195
    %v197 = vtanh.pop %v187
    %v198 = vmul.f32 %v196, %v96
    %200 = vrot.lane.b32.xlu0 %v197, 80
    %v201 = vpop.permute.xlu0 %200
    %v203 = vmul.f32 %v196, %v201
    %205 = vrot.lane.b32.xlu0 %v203, 16
    %v206 = vpop.permute.xlu0 %205
    %v208 = vadd.f32 %v198, %v206
    %v209 = vtanh.pop %v208
    %211 = vrot.lane.b32.xlu0 %v209, 16
    %v212 = vpop.permute.xlu0 %211
    %v214 = vmul.f32 %v196, %v212
    %v215 = vxor.u32 %v190, 2147483648
    %v216 = vmul.f32 %v215, 1.442695
    %v217 = vpow.pop %v216
    %v218 = vadd.f32 %v217, 1.0
    %v219 = vrcp.pop %v218
    %v220 = vmul.f32 1.0, %v219
    %v221 = vtanh.pop %v190
    %v222 = vmul.f32 %v220, %v98
    %224 = vrot.lane.b32.xlu0 %v221, 80
    %v225 = vpop.permute.xlu0 %224
    %v227 = vmul.f32 %v220, %v225
    %229 = vrot.lane.b32.xlu0 %v227, 16
    %v230 = vpop.permute.xlu0 %229
    %v232 = vadd.f32 %v222, %v230
    %v233 = vtanh.pop %v232
    %235 = vrot.lane.b32.xlu0 %v233, 16
    %v236 = vpop.permute.xlu0 %235
    %v238 = vmul.f32 %v220, %v236
    %240 = vrot.lane.b32.xlu0 %v214, 96
    %v241 = vpop.permute.xlu0 %240
    %s243 = scalar_lea.vmem %s4, %s100
    %vm244 = vcmask 123904
    %245 = vst.msk [vmem:[%s243] sm:$0x3] %vm244, %v241
    %247 = vrot.lane.b32.xlu0 %v238, 32
    %v248 = vpop.permute.xlu0 %247
    %s250 = scalar_lea.vmem %s5, %s101
    %251 = vst.msk [vmem:[%s250] sm:$0x3] %vm244, %v248
  $region22: #{elmo_forward.5} parent=0 // loop_footer
    %s94 = sadd.s32 1, %s90
  $region23: #{elmo_forward.5} parent=0 // loop_footer_branch
    %89 = sbr.rel target = $region19
  $region24: #{elmo_forward.5} parent=0 // loop_exit
    _
  // Predicated region
  $region25: #{elmo_forward.5} parent=0 // pred_check
    _
  $region26: #{elmo_forward.5} parent=0 // pred_check_branch
    %253 = sbr.rel (0) target = $region28
  $region27: #{elmo_forward.5} parent=0 // pred_region
    _
  $region28: #{elmo_forward.5} parent=0 // pred_fallthru
    _
  // Predicated region
  $region29: #{elmo_forward.5} parent=0 // pred_check
    _
  $region30: #{elmo_forward.5} parent=0 // pred_check_branch
    %255 = sbr.rel (0) target = $region32
  $region31: #{elmo_forward.5} parent=0 // pred_region
    _
  $region32: #{elmo_forward.5} parent=0 // pred_fallthru
    _
  // Predicated region
  $region33: #{elmo_forward.5} parent=0 // pred_check
    _
  $region34: #{elmo_forward.5} parent=0 // pred_check_branch
    %257 = sbr.rel (0) target = $region36
  $region35: #{elmo_forward.5} parent=0 // pred_region
    _
  $region36: #{elmo_forward.5} parent=0 // pred_fallthru
    _
  // Predicated region
  $region37: #{elmo_forward.5} parent=0 // pred_check
    _
  $region38: #{elmo_forward.5} parent=0 // pred_check_branch
    %259 = sbr.rel (0) target = $region40
  $region39: #{elmo_forward.5} parent=0 // pred_region
    _
  $region40: #{elmo_forward.5} parent=0 // pred_fallthru
    _

// kernel: elmo_forward.6
$region0: #{elmo_forward.6}
  #allocation0 [shape = 'u32[]', space=smem, size = 0x4, offset = 0x4, fixed_abs, tag = 'smem constant byte address 0x4 - core index']
  #allocation1 [shape = 'u32[144,128]{1,0:T(1,128)}', space=vmem, size = 0x12000, scoped, tag = 'internal scratch']
  #allocation2 [shape = 'f32[16,128]{1,0:T(8,128)}', space=vmem, size = 0x2000, scoped, tag = 'scratch operand']
  %s0 = inlined_call_operand.vmem [shape: f32[16,16], index: 0, kind: input, shape index: {}]
  %s1 = inlined_call_operand.vmem [shape: f32[16,16], index: 1, kind: input, shape index: {}]
  %s2 = inlined_call_operand.vmem [shape: bf16[32,128], index: 2, kind: input, shape index: {}]
  %s3 = inlined_call_operand.vmem [shape: f32[1,128], index: 3, kind: input, shape index: {}]
  %s4 = inlined_call_operand.vmem [shape: f32[32,128], index: 4, kind: input, shape index: {}]
  %s5 = inlined_call_operand.vmem [shape: f32[16,16], index: 5, kind: output, shape index: {0}]
  %s6 = inlined_call_operand.vmem [shape: f32[16,16], index: 6, kind: output, shape index: {1}]
  %7 = xla_tuple %s5, %s6
  %s8 = sld [smem:[#allocation0]]
  $region45: #{elmo_forward.6} parent=0
    _
  %s10 = ssub.s32 1, %s8
  %s11 = scalar_select 0, %s10, %s8
  // Predicated region
  $region2: #{elmo_forward.6} parent=0 // pred_check
    _
  $region3: #{elmo_forward.6} parent=0 // pred_check_branch
    %13 = sbr.rel (0) target = $region5
  $region4: #{elmo_forward.6} parent=0 // pred_region
    _
  $region5: #{elmo_forward.6} parent=0 // pred_fallthru
    _
  // Predicated region
  $region6: #{elmo_forward.6} parent=0 // pred_check
    _
  $region7: #{elmo_forward.6} parent=0 // pred_check_branch
    %15 = sbr.rel (0) target = $region9
  $region8: #{elmo_forward.6} parent=0 // pred_region
    _
  $region9: #{elmo_forward.6} parent=0 // pred_fallthru
    _
  // Predicated region
  $region10: #{elmo_forward.6} parent=0 // pred_check
    _
  $region11: #{elmo_forward.6} parent=0 // pred_check_branch
    %17 = sbr.rel (0) target = $region13
  $region12: #{elmo_forward.6} parent=0 // pred_region
    _
  $region13: #{elmo_forward.6} parent=0 // pred_fallthru
    _
  // Predicated region
  $region14: #{elmo_forward.6} parent=0 // pred_check
    _
  $region15: #{elmo_forward.6} parent=0 // pred_check_branch
    %19 = sbr.rel (0) target = $region17
  $region16: #{elmo_forward.6} parent=0 // pred_region
    _
  $region17: #{elmo_forward.6} parent=0 // pred_fallthru
    _
  // Predicated region
  $region18: #{elmo_forward.6} parent=0 // pred_check
    _
  $region19: #{elmo_forward.6} parent=0 // pred_check_branch
    %21 = sbr.rel (0) target = $region21
  $region20: #{elmo_forward.6} parent=0 // pred_region
    _
  $region21: #{elmo_forward.6} parent=0 // pred_fallthru
    _
  %v23 = vld [vmem:[%s0] sm:$0xff]
  %v24 = vld [vmem:[%s0 + $0x8] sm:$0xff]
  %v25 = vpack.c.bf16 %v24, %v23
  %v26 = vld [vmem:[%s2] sm:$0xf]
  %v27 = vld [vmem:[%s2 + $0x4] sm:$0xf]
  %v28 = vld [vmem:[%s1] sm:$0xff]
  %v29 = vld [vmem:[%s1 + $0x8] sm:$0xff]
  %v30 = vpack.c.bf16 %v29, %v28
  %v31 = vld [vmem:[%s2 + $0x8] sm:$0xf]
  %v32 = vld [vmem:[%s2 + $0xc] sm:$0xf]
  %v35 = vunpack.c.l.b16 %v31
  %v36 = vunpack.c.l.b16 %v32
  %v37 = vpack.c.b16 %v36, %v35
  %vm39 = vcmask 130048
  %v41 = vsel %vm39, %v30, 0
  %43 = vmatprep.subr.bf16.mxu0 0
  %44 = vmatpush1.bf16.msra.mxu0 0
  %45 = vmatprep.subr.bf16.mxu0 0
  %46 = vmatpush1.bf16.msra.mxu0 0
  %47 = vmatprep.subr.bf16.mxu0 0
  %48 = vmatpush1.bf16.msra.mxu0 0
  %49 = vmatprep.subr.bf16.mxu0 0
  %50 = vmatpush1.bf16.msra.mxu0 0
  %51 = vmatprep.subr.bf16.mxu0 0
  %52 = vmatpush1.bf16.msra.mxu0 0
  %53 = vmatprep.subr.bf16.mxu0 0
  %54 = vmatpush1.bf16.msra.mxu0 0
  %55 = vmatprep.subr.bf16.mxu0 0
  %56 = vmatpush1.bf16.msra.mxu0 0
  %57 = vmatprep.subr.bf16.mxu0 0
  %58 = vmatpush1.bf16.msra.mxu0 %v37
  %59 = vmatprep.subr.bf16.mxu0 0
  %60 = vmatpush2.bf16.msra.mxu0 0
  %61 = vmatprep.subr.bf16.mxu0 0
  %62 = vmatpush2.bf16.msra.mxu0 0
  %63 = vmatprep.subr.bf16.mxu0 0
  %64 = vmatpush2.bf16.msra.mxu0 0
  %65 = vmatprep.subr.bf16.mxu0 0
  %66 = vmatpush2.bf16.msra.mxu0 0
  %67 = vmatprep.subr.bf16.mxu0 0
  %68 = vmatpush2.bf16.msra.mxu0 0
  %69 = vmatprep.subr.bf16.mxu0 0
  %70 = vmatpush2.bf16.msra.mxu0 0
  %71 = vmatprep.subr.bf16.mxu0 0
  %72 = vmatpush2.bf16.msra.mxu0 0
  %73 = vmatprep.subr.bf16.mxu0 0
  %74 = vmatpush2.bf16.msra.mxu0 0
  %75 = vmatprep.mubr.bf16.mxu0 0
  %76 = vmatmul.mubr.bf16.gmra.mxu0 %v41
  %v77 = vpop.f32.mrf.mxu0
  %v78 = vadd.f32 0.0, %v77
  %v79 = vpop.f32.mrf.mxu0
  %v80 = vpop.f32.mrf.mxu0
  %v81 = vadd.f32 0.0, %v80
  %v82 = vpop.f32.mrf.mxu0
  %83 = vdwg.mxu0
  %v86 = vunpack.c.l.b16 %v26
  %v87 = vunpack.c.l.b16 %v27
  %v88 = vpack.c.b16 %v87, %v86
  %v91 = vsel %vm39, %v25, 0
  %93 = vmatprep.subr.bf16.mxu0 0
  %94 = vmatpush1.bf16.msra.mxu0 0
  %95 = vmatprep.subr.bf16.mxu0 0
  %96 = vmatpush1.bf16.msra.mxu0 0
  %97 = vmatprep.subr.bf16.mxu0 0
  %98 = vmatpush1.bf16.msra.mxu0 0
  %99 = vmatprep.subr.bf16.mxu0 0
  %100 = vmatpush1.bf16.msra.mxu0 0
  %101 = vmatprep.subr.bf16.mxu0 0
  %102 = vmatpush1.bf16.msra.mxu0 0
  %103 = vmatprep.subr.bf16.mxu0 0
  %104 = vmatpush1.bf16.msra.mxu0 0
  %105 = vmatprep.subr.bf16.mxu0 0
  %106 = vmatpush1.bf16.msra.mxu0 0
  %107 = vmatprep.subr.bf16.mxu0 0
  %108 = vmatpush1.bf16.msra.mxu0 %v88
  %109 = vmatprep.subr.bf16.mxu0 0
  %110 = vmatpush2.bf16.msra.mxu0 0
  %111 = vmatprep.subr.bf16.mxu0 0
  %112 = vmatpush2.bf16.msra.mxu0 0
  %113 = vmatprep.subr.bf16.mxu0 0
  %114 = vmatpush2.bf16.msra.mxu0 0
  %115 = vmatprep.subr.bf16.mxu0 0
  %116 = vmatpush2.bf16.msra.mxu0 0
  %117 = vmatprep.subr.bf16.mxu0 0
  %118 = vmatpush2.bf16.msra.mxu0 0
  %119 = vmatprep.subr.bf16.mxu0 0
  %120 = vmatpush2.bf16.msra.mxu0 0
  %121 = vmatprep.subr.bf16.mxu0 0
  %122 = vmatpush2.bf16.msra.mxu0 0
  %123 = vmatprep.subr.bf16.mxu0 0
  %124 = vmatpush2.bf16.msra.mxu0 0
  %125 = vmatprep.mubr.bf16.mxu0 0
  %126 = vmatmul.mubr.bf16.gmra.mxu0 %v91
  %v127 = vpop.f32.mrf.mxu0
  %v128 = vadd.f32 %v78, %v127
  %v129 = vpop.f32.mrf.mxu0
  %v130 = vpop.f32.mrf.mxu0
  %v131 = vadd.f32 %v81, %v130
  %v132 = vpop.f32.mrf.mxu0
  %133 = vdwg.mxu0
  %v134 = vld [vmem:[%s3] sm:$0x1]
  %v136 = vlaneseq
  %v137 = vshrl.u32 %v136, 7
  %v138 = vsub.s32 0, %v137
  %v139 = vrot.slane %v134, %v138
  %v141 = vadd.f32 %v128, %v139
  %v142 = vadd.f32 %v131, %v139
  %143 = vst [vmem:[#allocation2] sm:$0xff] %v141
  %144 = vst [vmem:[#allocation2 + $0x8] sm:$0xff] %v142
  %v145 = vld [vmem:[%s4] sm:$0xff]
  %v146 = vld [vmem:[%s4 + $0x8] sm:$0xff]
  %v147 = vld [vmem:[%s4 + $0x10] sm:$0xff]
  %v148 = vld [vmem:[%s4 + $0x18] sm:$0xff]
  loop: start=0, step=1, limit=8
  $region22: #{elmo_forward.6} parent=0 // loop_pre_header
    _
  $region23: #{elmo_forward.6} parent=0 // loop_header
    %s150 = sphi 0, %s154
    %p151 = scmp.ge.s32.totalorder %s150, 8
    %v155 = vphi 0.0, %v274
    %v156 = vphi 0.0, %v268
    %v157 = vphi 0.0, %v298
    %v158 = vphi 0.0, %v292
  $region24: #{elmo_forward.6} parent=0 // loop_header_branch
    %153 = sbr.rel (%p151) target = $region28
  $region25: #{elmo_forward.6} parent=0 // loop_body
    %s159 = ssub.s32 7, %s150
    %s160 = smul.u32 %s150, 2
    %s161 = smul.u32 %s159, 2
    %163 = vrot.lane.b32.xlu0 %v155, 96
    %v164 = vpop.permute.xlu0 %163
    %167 = vrot.lane.b32.xlu0 %v157, 48
    %v168 = vpop.permute.xlu0 %167
    %v170 = vsel %vm39, %v164, %v168
    %vm171 = vcmask 261120
    %v173 = vsel %vm171, %v170, 0
    %175 = vmatprep.subr.mxu0 0.0
    %176 = vmatpush1.msra.mxu0 0.0
    %177 = vmatprep.subr.mxu0 0.0
    %178 = vmatpush1.msra.mxu0 0.0
    %179 = vmatprep.subr.mxu0 0.0
    %180 = vmatpush1.msra.mxu0 0.0
    %181 = vmatprep.subr.mxu0 0.0
    %182 = vmatpush1.msra.mxu0 0.0
    %183 = vmatprep.subr.mxu0 0.0
    %184 = vmatpush1.msra.mxu0 0.0
    %185 = vmatprep.subr.mxu0 0.0
    %186 = vmatpush1.msra.mxu0 0.0
    %187 = vmatprep.subr.mxu0 0.0
    %188 = vmatpush1.msra.mxu0 0.0
    %189 = vmatprep.subr.mxu0 0.0
    %190 = vmatpush1.msra.mxu0 0.0
    %191 = vmatprep.subr.mxu0 0.0
    %192 = vmatpush1.msra.mxu0 0.0
    %193 = vmatprep.subr.mxu0 0.0
    %194 = vmatpush1.msra.mxu0 0.0
    %195 = vmatprep.subr.mxu0 0.0
    %196 = vmatpush1.msra.mxu0 0.0
    %197 = vmatprep.subr.mxu0 0.0
    %198 = vmatpush1.msra.mxu0 0.0
    %199 = vmatprep.subr.mxu0 0.0
    %200 = vmatpush1.msra.mxu0 %v148
    %201 = vmatprep.subr.mxu0 0.0
    %202 = vmatpush1.msra.mxu0 %v147
    %203 = vmatprep.subr.mxu0 0.0
    %204 = vmatpush1.msra.mxu0 %v146
    %205 = vmatprep.subr.mxu0 0.0
    %206 = vmatpush1.msra.mxu0 %v145
    %207 = vmatprep.subr.mxu0 0.0
    %208 = vmatpush2.msra.mxu0 0.0
    %209 = vmatprep.subr.mxu0 0.0
    %210 = vmatpush2.msra.mxu0 0.0
    %211 = vmatprep.subr.mxu0 0.0
    %212 = vmatpush2.msra.mxu0 0.0
    %213 = vmatprep.subr.mxu0 0.0
    %214 = vmatpush2.msra.mxu0 0.0
    %215 = vmatprep.subr.mxu0 0.0
    %216 = vmatpush2.msra.mxu0 0.0
    %217 = vmatprep.subr.mxu0 0.0
    %218 = vmatpush2.msra.mxu0 0.0
    %219 = vmatprep.subr.mxu0 0.0
    %220 = vmatpush2.msra.mxu0 0.0
    %221 = vmatprep.subr.mxu0 0.0
    %222 = vmatpush2.msra.mxu0 0.0
    %223 = vmatprep.subr.mxu0 0.0
    %224 = vmatpush2.msra.mxu0 0.0
    %225 = vmatprep.subr.mxu0 0.0
    %226 = vmatpush2.msra.mxu0 0.0
    %227 = vmatprep.subr.mxu0 0.0
    %228 = vmatpush2.msra.mxu0 0.0
    %229 = vmatprep.subr.mxu0 0.0
    %230 = vmatpush2.msra.mxu0 0.0
    %231 = vmatprep.subr.mxu0 0.0
    %232 = vmatpush2.msra.mxu0 0.0
    %233 = vmatprep.subr.mxu0 0.0
    %234 = vmatpush2.msra.mxu0 0.0
    %235 = vmatprep.subr.mxu0 0.0
    %236 = vmatpush2.msra.mxu0 0.0
    %237 = vmatprep.subr.mxu0 0.0
    %238 = vmatpush2.msra.mxu0 0.0
    %239 = vmatprep.mubr.f32.mxu0 0.0
    %240 = vmatmul.mubr.f32.gmra.mxu0 %v173
    %v241 = vpop.f32.mrf.mxu0
    %v242 = vadd.f32 0.0, %v241
    %v243 = vpop.f32.mrf.mxu0
    %244 = vdwg.mxu0
    %s245 = scalar_lea.vmem [#allocation2], %s160
    %v246 = vld [vmem:[%s245] sm:$0x3]
    %v247 = vadd.f32 %v246, %v242
    %s248 = scalar_lea.vmem [#allocation2], %s161
    %v249 = vld [vmem:[%s248] sm:$0x3]
    %v250 = vadd.f32 %v249, %v242
    %v251 = vxor.u32 %v247, 2147483648
    %v252 = vmul.f32 %v251, 1.442695
    %v253 = vpow.pop %v252
    %v254 = vadd.f32 %v253, 1.0
    %v255 = vrcp.pop %v254
    %v256 = vmul.f32 1.0, %v255
    %v257 = vtanh.pop %v247
    %v258 = vmul.f32 %v256, %v156
    %260 = vrot.lane.b32.xlu0 %v257, 80
    %v261 = vpop.permute.xlu0 %260
    %v263 = vmul.f32 %v256, %v261
    %265 = vrot.lane.b32.xlu0 %v263, 16
    %v266 = vpop.permute.xlu0 %265
    %v268 = vadd.f32 %v258, %v266
    %v269 = vtanh.pop %v268
    %271 = vrot.lane.b32.xlu0 %v269, 16
    %v272 = vpop.permute.xlu0 %271
    %v274 = vmul.f32 %v256, %v272
    %v275 = vxor.u32 %v250, 2147483648
    %v276 = vmul.f32 %v275, 1.442695
    %v277 = vpow.pop %v276
    %v278 = vadd.f32 %v277, 1.0
    %v279 = vrcp.pop %v278
    %v280 = vmul.f32 1.0, %v279
    %v281 = vtanh.pop %v250
    %v282 = vmul.f32 %v280, %v158
    %284 = vrot.lane.b32.xlu0 %v281, 80
    %v285 = vpop.permute.xlu0 %284
    %v287 = vmul.f32 %v280, %v285
    %289 = vrot.lane.b32.xlu0 %v287, 16
    %v290 = vpop.permute.xlu0 %289
    %v292 = vadd.f32 %v282, %v290
    %v293 = vtanh.pop %v292
    %295 = vrot.lane.b32.xlu0 %v293, 16
    %v296 = vpop.permute.xlu0 %295
    %v298 = vmul.f32 %v280, %v296
    %300 = vrot.lane.b32.xlu0 %v274, 96
    %v301 = vpop.permute.xlu0 %300
    %s303 = scalar_lea.vmem %s5, %s160
    %vm304 = vcmask 123904
    %305 = vst.msk [vmem:[%s303] sm:$0x3] %vm304, %v301
    %307 = vrot.lane.b32.xlu0 %v298, 32
    %v308 = vpop.permute.xlu0 %307
    %s310 = scalar_lea.vmem %s6, %s161
    %311 = vst.msk [vmem:[%s310] sm:$0x3] %vm304, %v308
  $region26: #{elmo_forward.6} parent=0 // loop_footer
    %s154 = sadd.s32 1, %s150
  $region27: #{elmo_forward.6} parent=0 // loop_footer_branch
    %149 = sbr.rel target = $region23
  $region28: #{elmo_forward.6} parent=0 // loop_exit
    _
  // Predicated region
  $region29: #{elmo_forward.6} parent=0 // pred_check
    _
  $region30: #{elmo_forward.6} parent=0 // pred_check_branch
    %313 = sbr.rel (0) target = $region32
  $region31: #{elmo_forward.6} parent=0 // pred_region
    _
  $region32: #{elmo_forward.6} parent=0 // pred_fallthru
    _
  // Predicated region
  $region33: #{elmo_forward.6} parent=0 // pred_check
    _
  $region34: #{elmo_forward.6} parent=0 // pred_check_branch
    %315 = sbr.rel (0) target = $region36
  $region35: #{elmo_forward.6} parent=0 // pred_region
    _
  $region36: #{elmo_forward.6} parent=0 // pred_fallthru
    _
  // Predicated region
  $region37: #{elmo_forward.6} parent=0 // pred_check
    _
  $region38: #{elmo_forward.6} parent=0 // pred_check_branch
    %317 = sbr.rel (0) target = $region40
  $region39: #{elmo_forward.6} parent=0 // pred_region
    _
  $region40: #{elmo_forward.6} parent=0 // pred_fallthru
    _
  // Predicated region
  $region41: #{elmo_forward.6} parent=0 // pred_check
    _
  $region42: #{elmo_forward.6} parent=0 // pred_check_branch
    %319 = sbr.rel (0) target = $region44
  $region43: #{elmo_forward.6} parent=0 // pred_region
    _
  $region44: #{elmo_forward.6} parent=0 // pred_fallthru
    _

// kernel: elmo_forward.7
$region0: #{elmo_forward.7}
  #allocation0 [shape = 'u32[]', space=smem, size = 0x4, offset = 0x4, fixed_abs, tag = 'smem constant byte address 0x4 - core index']
  #allocation1 [shape = 'u32[144,128]{1,0:T(1,128)}', space=vmem, size = 0x12000, scoped, tag = 'internal scratch']
  %s0 = inlined_call_operand.vmem [shape: f32[8,2,16], index: 0, kind: input, shape index: {}]
  %s1 = inlined_call_operand.vmem [shape: f32[8,2,16], index: 1, kind: input, shape index: {}]
  %s2 = inlined_call_operand.vmem [shape: bf16[16,32], index: 2, kind: input, shape index: {}]
  %s3 = inlined_call_operand.vmem [shape: f32[1,32], index: 3, kind: input, shape index: {}]
  %s4 = inlined_call_operand.vmem [shape: bf16[16,32], index: 4, kind: input, shape index: {}]
  %s5 = inlined_call_operand.vmem [shape: f32[1,32], index: 5, kind: input, shape index: {}]
  %s6 = inlined_call_operand.vmem [shape: f32[8,2,32], index: 6, kind: output, shape index: {0}]
  %s7 = inlined_call_operand.vmem [shape: f32[8,2,32], index: 7, kind: output, shape index: {1}]
  %8 = xla_tuple %s6, %s7
  %s9 = sld [smem:[#allocation0]]
  $region65: #{elmo_forward.7} parent=0
    _
  %s11 = ssub.s32 1, %s9
  %s12 = scalar_select 0, %s11, %s9
  loop: start=0, step=1, limit=10
  $region2: #{elmo_forward.7} parent=0 // loop_pre_header
    _
  $region3: #{elmo_forward.7} parent=0 // loop_header
    %s14 = sphi 0, %s18
    %p15 = scmp.ge.s32.totalorder %s14, 10
    %s24 = sphi 0, %s26
    %s27 = sphi 0, %s24
    %s28 = sphi 0, %s27
    %s44 = sphi 0, %s28
    %s50 = sphi 0, %s52
    %s53 = sphi 0, %s50
    %s54 = sphi 0, %s53
    %s70 = sphi 0, %s54
    %s74 = sphi 0, %s74
    %s76 = sphi 0, %s74
    %s77 = sphi 0, %s76
    %s91 = sphi 0, %s77
    %s95 = sphi 0, %s95
    %s97 = sphi 0, %s95
    %s98 = sphi 0, %s97
    %s112 = sphi 0, %s98
    %s116 = sphi 0, %s116
    %s118 = sphi 0, %s116
    %s119 = sphi 0, %s118
    %s133 = sphi 0, %s119
    %s137 = sphi 0, %s137
    %s139 = sphi 0, %s137
    %s140 = sphi 0, %s139
    %s154 = sphi 0, %s140
    %s160 = sphi 0, %s162
    %s163 = sphi 0, %s160
    %s164 = sphi 0, %s163
    %s180 = sphi 0, %s164
    %s186 = sphi 0, %s188
    %s189 = sphi 0, %s186
    %s190 = sphi 0, %s189
    %s206 = sphi 0, %s190
  $region4: #{elmo_forward.7} parent=0 // loop_header_branch
    %17 = sbr.rel (%p15) target = $region8
  $region5: #{elmo_forward.7} parent=0 // loop_body
    %s19 = ssub.s32 %s14, 1
    %s20 = ssub.s32 %s14, 2
    %s21 = sadd.s32 %s14, 1
    %s22 = ssub.s32 %s14, %s21
    %p23 = scmp.eq.s32.totalorder %s22, 0
    %s25 = sadd.s32 %s24, 1
    %s26 = scalar_select %p23, %s24, %s25
    %p29 = pneg %p23
    %p30 = scmp.eq.s32.totalorder %s14, 7
    %p31 = por %p29, %p30
    %p32 = scmp.ne.s32.totalorder %s24, %s27
    %p33 = scmp.eq.s32.totalorder %s14, 0
    %p34 = por %p32, %p33
    %p35 = scmp.ne.s32.totalorder %s24, %s27
    %p36 = scmp.eq.s32.totalorder %s19, 7
    %p37 = por %p35, %p36
    %p38 = scmp.ne.s32.totalorder %s27, %s28
    %p39 = scmp.eq.s32.totalorder %s19, 0
    %p40 = por %p38, %p39
    %p41 = scmp.ne.s32.totalorder %s27, %s28
    %p42 = scmp.eq.s32.totalorder %s20, 7
    %p43 = por %p41, %p42
    %p45 = scmp.ne.s32.totalorder %s28, %s44
    %p46 = scmp.eq.s32.totalorder %s20, 0
    %p47 = por %p45, %p46
    %s48 = ssub.s32 %s14, %s21
    %p49 = scmp.eq.s32.totalorder %s48, 0
    %s51 = sadd.s32 %s50, 1
    %s52 = scalar_select %p49, %s50, %s51
    %p55 = pneg %p49
    %p56 = scmp.eq.s32.totalorder %s14, 7
    %p57 = por %p55, %p56
    %p58 = scmp.ne.s32.totalorder %s50, %s53
    %p59 = scmp.eq.s32.totalorder %s14, 0
    %p60 = por %p58, %p59
    %p61 = scmp.ne.s32.totalorder %s50, %s53
    %p62 = scmp.eq.s32.totalorder %s19, 7
    %p63 = por %p61, %p62
    %p64 = scmp.ne.s32.totalorder %s53, %s54
    %p65 = scmp.eq.s32.totalorder %s19, 0
    %p66 = por %p64, %p65
    %p67 = scmp.ne.s32.totalorder %s53, %s54
    %p68 = scmp.eq.s32.totalorder %s20, 7
    %p69 = por %p67, %p68
    %p71 = scmp.ne.s32.totalorder %s54, %s70
    %p72 = scmp.eq.s32.totalorder %s20, 0
    %p73 = por %p71, %p72
    %s75 = sadd.s32 %s74, 1
    %p78 = scmp.eq.s32.totalorder %s14, 7
    %p79 = scmp.ne.s32.totalorder %s74, %s76
    %p80 = scmp.eq.s32.totalorder %s14, 0
    %p81 = por %p79, %p80
    %p82 = scmp.ne.s32.totalorder %s74, %s76
    %p83 = scmp.eq.s32.totalorder %s19, 7
    %p84 = por %p82, %p83
    %p85 = scmp.ne.s32.totalorder %s76, %s77
    %p86 = scmp.eq.s32.totalorder %s19, 0
    %p87 = por %p85, %p86
    %p88 = scmp.ne.s32.totalorder %s76, %s77
    %p89 = scmp.eq.s32.totalorder %s20, 7
    %p90 = por %p88, %p89
    %p92 = scmp.ne.s32.totalorder %s77, %s91
    %p93 = scmp.eq.s32.totalorder %s20, 0
    %p94 = por %p92, %p93
    %s96 = sadd.s32 %s95, 1
    %p99 = scmp.eq.s32.totalorder %s14, 7
    %p100 = scmp.ne.s32.totalorder %s95, %s97
    %p101 = scmp.eq.s32.totalorder %s14, 0
    %p102 = por %p100, %p101
    %p103 = scmp.ne.s32.totalorder %s95, %s97
    %p104 = scmp.eq.s32.totalorder %s19, 7
    %p105 = por %p103, %p104
    %p106 = scmp.ne.s32.totalorder %s97, %s98
    %p107 = scmp.eq.s32.totalorder %s19, 0
    %p108 = por %p106, %p107
    %p109 = scmp.ne.s32.totalorder %s97, %s98
    %p110 = scmp.eq.s32.totalorder %s20, 7
    %p111 = por %p109, %p110
    %p113 = scmp.ne.s32.totalorder %s98, %s112
    %p114 = scmp.eq.s32.totalorder %s20, 0
    %p115 = por %p113, %p114
    %s117 = sadd.s32 %s116, 1
    %p120 = scmp.eq.s32.totalorder %s14, 7
    %p121 = scmp.ne.s32.totalorder %s116, %s118
    %p122 = scmp.eq.s32.totalorder %s14, 0
    %p123 = por %p121, %p122
    %p124 = scmp.ne.s32.totalorder %s116, %s118
    %p125 = scmp.eq.s32.totalorder %s19, 7
    %p126 = por %p124, %p125
    %p127 = scmp.ne.s32.totalorder %s118, %s119
    %p128 = scmp.eq.s32.totalorder %s19, 0
    %p129 = por %p127, %p128
    %p130 = scmp.ne.s32.totalorder %s118, %s119
    %p131 = scmp.eq.s32.totalorder %s20, 7
    %p132 = por %p130, %p131
    %p134 = scmp.ne.s32.totalorder %s119, %s133
    %p135 = scmp.eq.s32.totalorder %s20, 0
    %p136 = por %p134, %p135
    %s138 = sadd.s32 %s137, 1
    %p141 = scmp.eq.s32.totalorder %s14, 7
    %p142 = scmp.ne.s32.totalorder %s137, %s139
    %p143 = scmp.eq.s32.totalorder %s14, 0
    %p144 = por %p142, %p143
    %p145 = scmp.ne.s32.totalorder %s137, %s139
    %p146 = scmp.eq.s32.totalorder %s19, 7
    %p147 = por %p145, %p146
    %p148 = scmp.ne.s32.totalorder %s139, %s140
    %p149 = scmp.eq.s32.totalorder %s19, 0
    %p150 = por %p148, %p149
    %p151 = scmp.ne.s32.totalorder %s139, %s140
    %p152 = scmp.eq.s32.totalorder %s20, 7
    %p153 = por %p151, %p152
    %p155 = scmp.ne.s32.totalorder %s140, %s154
    %p156 = scmp.eq.s32.totalorder %s20, 0
    %p157 = por %p155, %p156
    %s158 = ssub.s32 %s14, %s21
    %p159 = scmp.eq.s32.totalorder %s158, 0
    %s161 = sadd.s32 %s160, 1
    %s162 = scalar_select %p159, %s160, %s161
    %p165 = pneg %p159
    %p166 = scmp.eq.s32.totalorder %s14, 7
    %p167 = por %p165, %p166
    %p168 = scmp.ne.s32.totalorder %s160, %s163
    %p169 = scmp.eq.s32.totalorder %s14, 0
    %p170 = por %p168, %p169
    %p171 = scmp.ne.s32.totalorder %s160, %s163
    %p172 = scmp.eq.s32.totalorder %s19, 7
    %p173 = por %p171, %p172
    %p174 = scmp.ne.s32.totalorder %s163, %s164
    %p175 = scmp.eq.s32.totalorder %s19, 0
    %p176 = por %p174, %p175
    %p177 = scmp.ne.s32.totalorder %s163, %s164
    %p178 = scmp.eq.s32.totalorder %s20, 7
    %p179 = por %p177, %p178
    %p181 = scmp.ne.s32.totalorder %s164, %s180
    %p182 = scmp.eq.s32.totalorder %s20, 0
    %p183 = por %p181, %p182
    %s184 = ssub.s32 %s14, %s21
    %p185 = scmp.eq.s32.totalorder %s184, 0
    %s187 = sadd.s32 %s186, 1
    %s188 = scalar_select %p185, %s186, %s187
    %p191 = pneg %p185
    %p192 = scmp.eq.s32.totalorder %s14, 7
    %p193 = por %p191, %p192
    %p194 = scmp.ne.s32.totalorder %s186, %s189
    %p195 = scmp.eq.s32.totalorder %s14, 0
    %p196 = por %p194, %p195
    %p197 = scmp.ne.s32.totalorder %s186, %s189
    %p198 = scmp.eq.s32.totalorder %s19, 7
    %p199 = por %p197, %p198
    %p200 = scmp.ne.s32.totalorder %s189, %s190
    %p201 = scmp.eq.s32.totalorder %s19, 0
    %p202 = por %p200, %p201
    %p203 = scmp.ne.s32.totalorder %s189, %s190
    %p204 = scmp.eq.s32.totalorder %s20, 7
    %p205 = por %p203, %p204
    %p207 = scmp.ne.s32.totalorder %s190, %s206
    %p208 = scmp.eq.s32.totalorder %s20, 0
    %p209 = por %p207, %p208
    %p210 = scmp.le.s32.totalorder 1, %s14
    %p211 = scmp.lt.s32.totalorder %s14, 9
    %p212 = pnand %p210, %p211
    %p213 = pneg %p212
    // Predicated region
    $region9: #{elmo_forward.7} parent=5 // pred_check
      _
    $region10: #{elmo_forward.7} parent=5 // pred_check_branch
      %215 = sbr.rel (%p212) target = $region12
    $region11: #{elmo_forward.7} parent=5 // pred_region
      %s216 = ssub.s32 %s14, 1
      // Predicated region
      $region13: #{elmo_forward.7} parent=11 // pred_check
        %p217 = pneg %p87
      $region14: #{elmo_forward.7} parent=11 // pred_check_branch
        %219 = sbr.rel (%p217) target = $region16
      $region15: #{elmo_forward.7} parent=11 // pred_region
        _
      $region16: #{elmo_forward.7} parent=11 // pred_fallthru
        _
      // Predicated region
      $region17: #{elmo_forward.7} parent=11 // pred_check
        %p220 = pneg %p108
      $region18: #{elmo_forward.7} parent=11 // pred_check_branch
        %222 = sbr.rel (%p220) target = $region20
      $region19: #{elmo_forward.7} parent=11 // pred_region
        _
      $region20: #{elmo_forward.7} parent=11 // pred_fallthru
        _
      // Predicated region
      $region21: #{elmo_forward.7} parent=11 // pred_check
        %p223 = pneg %p129
      $region22: #{elmo_forward.7} parent=11 // pred_check_branch
        %225 = sbr.rel (%p223) target = $region24
      $region23: #{elmo_forward.7} parent=11 // pred_region
        _
      $region24: #{elmo_forward.7} parent=11 // pred_fallthru
        _
      // Predicated region
      $region25: #{elmo_forward.7} parent=11 // pred_check
        %p226 = pneg %p150
      $region26: #{elmo_forward.7} parent=11 // pred_check_branch
        %228 = sbr.rel (%p226) target = $region28
      $region27: #{elmo_forward.7} parent=11 // pred_region
        _
      $region28: #{elmo_forward.7} parent=11 // pred_fallthru
        _
    $region12: #{elmo_forward.7} parent=5 // pred_fallthru
      _
    %p229 = scmp.lt.s32.totalorder %s14, 8
    // Predicated region
    $region29: #{elmo_forward.7} parent=5 // pred_check
      %p230 = pneg %p229
    $region30: #{elmo_forward.7} parent=5 // pred_check_branch
      %232 = sbr.rel (%p230) target = $region32
    $region31: #{elmo_forward.7} parent=5 // pred_region
      // Predicated region
      $region33: #{elmo_forward.7} parent=31 // pred_check
        %p233 = pneg %p34
      $region34: #{elmo_forward.7} parent=31 // pred_check_branch
        %235 = sbr.rel (%p233) target = $region36
      $region35: #{elmo_forward.7} parent=31 // pred_region
        %p236 = scmp.lt.s32.totalorder %s14, 7
        %s237 = scalar_select %p236, %s14, 7
        %s238 = smul.addr %s237, 2
        %s239 = scalar_lea.vmem %s0, %s238
      $region36: #{elmo_forward.7} parent=31 // pred_fallthru
        _
      // Predicated region
      $region37: #{elmo_forward.7} parent=31 // pred_check
        %p240 = pneg %p60
      $region38: #{elmo_forward.7} parent=31 // pred_check_branch
        %242 = sbr.rel (%p240) target = $region40
      $region39: #{elmo_forward.7} parent=31 // pred_region
        %p243 = scmp.lt.s32.totalorder %s14, 7
        %s244 = scalar_select %p243, %s14, 7
        %s245 = smul.addr %s244, 2
        %s246 = scalar_lea.vmem %s1, %s245
      $region40: #{elmo_forward.7} parent=31 // pred_fallthru
        _
    $region32: #{elmo_forward.7} parent=5 // pred_fallthru
      _
    %p247 = scmp.le.s32.totalorder 1, %s14
    %p248 = scmp.lt.s32.totalorder %s14, 9
    %p249 = pnand %p247, %p248
    %p250 = pneg %p249
    // Predicated region
    $region41: #{elmo_forward.7} parent=5 // pred_check
      _
    $region42: #{elmo_forward.7} parent=5 // pred_check_branch
      %252 = sbr.rel (%p249) target = $region44
    $region43: #{elmo_forward.7} parent=5 // pred_region
      %s253 = ssub.s32 %s14, 1
      %p254 = scmp.lt.s32.totalorder %s19, 7
      %s255 = scalar_select %p254, %s19, 7
      %s256 = smul.addr %s255, 2
      %s257 = scalar_lea.vmem %s0, %s256
      %p258 = pneg %p40
      %p259 = pneg %p37
      %p260 = scmp.lt.s32.totalorder %s19, 7
      %s261 = scalar_select %p260, %s19, 7
      %s262 = smul.addr %s261, 2
      %s263 = scalar_lea.vmem %s1, %s262
      %p264 = pneg %p66
      %p265 = pneg %p63
      %p266 = pneg %p87
      %p267 = pneg %p84
      %p268 = pneg %p108
      %p269 = pneg %p105
      %p270 = pneg %p129
      %p271 = pneg %p126
      %p272 = pneg %p150
      %p273 = pneg %p147
      %p274 = pneg %p176
      %p275 = pneg %p173
      %p276 = scmp.lt.s32.totalorder %s19, 7
      %s277 = scalar_select %p276, %s19, 7
      %s278 = smul.addr %s277, 2
      %s279 = scalar_lea.vmem %s6, %s278
      %p280 = pneg %p202
      %p281 = pneg %p199
      %p282 = scmp.lt.s32.totalorder %s19, 7
      %s283 = scalar_select %p282, %s19, 7
      %s284 = smul.addr %s283, 2
      %s285 = scalar_lea.vmem %s7, %s284
      %p286 = scmp.lt.s32.totalorder %s19, 7
      %s287 = scalar_select %p286, %s19, 7
      %s288 = smul.addr %s287, 2
      %s289 = scalar_lea.vmem %s0, %s288
      %p290 = scmp.lt.s32.totalorder %s19, 7
      %s291 = scalar_select %p290, %s19, 7
      %s292 = smul.addr %s291, 2
      %s293 = scalar_lea.vmem %s1, %s292
      %p294 = scmp.lt.s32.totalorder %s19, 7
      %s295 = scalar_select %p294, %s19, 7
      %s296 = smul.addr %s295, 2
      %s297 = scalar_lea.vmem %s6, %s296
      %p298 = scmp.lt.s32.totalorder %s19, 7
      %s299 = scalar_select %p298, %s19, 7
      %s300 = smul.addr %s299, 2
      %s301 = scalar_lea.vmem %s7, %s300
      %v303 = vld [vmem:[%s289] sm:$0x3]
      %v304 = vpack.c.bf16 %v303, %v303
      %v305 = vld [vmem:[%s293] sm:$0x3]
      %v306 = vpack.c.bf16 %v305, %v305
      %v307 = vld [vmem:[%s2] sm:$0xf]
      %v308 = vld [vmem:[%s2 + $0x4] sm:$0xf]
      %v309 = vld [vmem:[%s3] sm:$0x1]
      %v311 = vlaneseq
      %v312 = vshrl.u32 %v311, 7
      %v313 = vsub.s32 0, %v312
      %v314 = vrot.slane %v309, %v313
      %v318 = vunpack.c.l.b16 %v307
      %v319 = vunpack.c.l.b16 %v308
      %v320 = vpack.c.b16 %v319, %v318
      %vm322 = vcmask 130048
      %v324 = vsel %vm322, %v304, 0
      %326 = vmatprep.subr.bf16.mxu0 0
      %327 = vmatpush1.bf16.msra.mxu0 0
      %328 = vmatprep.subr.bf16.mxu0 0
      %329 = vmatpush1.bf16.msra.mxu0 0
      %330 = vmatprep.subr.bf16.mxu0 0
      %331 = vmatpush1.bf16.msra.mxu0 0
      %332 = vmatprep.subr.bf16.mxu0 0
      %333 = vmatpush1.bf16.msra.mxu0 0
      %334 = vmatprep.subr.bf16.mxu0 0
      %335 = vmatpush1.bf16.msra.mxu0 0
      %336 = vmatprep.subr.bf16.mxu0 0
      %337 = vmatpush1.bf16.msra.mxu0 0
      %338 = vmatprep.subr.bf16.mxu0 0
      %339 = vmatpush1.bf16.msra.mxu0 0
      %340 = vmatprep.subr.bf16.mxu0 0
      %341 = vmatpush1.bf16.msra.mxu0 %v320
      %342 = vmatprep.subr.bf16.mxu0 0
      %343 = vmatpush2.bf16.msra.mxu0 0
      %344 = vmatprep.subr.bf16.mxu0 0
      %345 = vmatpush2.bf16.msra.mxu0 0
      %346 = vmatprep.subr.bf16.mxu0 0
      %347 = vmatpush2.bf16.msra.mxu0 0
      %348 = vmatprep.subr.bf16.mxu0 0
      %349 = vmatpush2.bf16.msra.mxu0 0
      %350 = vmatprep.subr.bf16.mxu0 0
      %351 = vmatpush2.bf16.msra.mxu0 0
      %352 = vmatprep.subr.bf16.mxu0 0
      %353 = vmatpush2.bf16.msra.mxu0 0
      %354 = vmatprep.subr.bf16.mxu0 0
      %355 = vmatpush2.bf16.msra.mxu0 0
      %356 = vmatprep.subr.bf16.mxu0 0
      %357 = vmatpush2.bf16.msra.mxu0 0
      %358 = vmatprep.mubr.bf16.mxu0 0
      %359 = vmatmul.mubr.bf16.gmra.mxu0 %v324
      %v360 = vpop.f32.mrf.mxu0
      %v361 = vadd.f32 %v314, %v360
      %v362 = vpop.f32.mrf.mxu0
      %v363 = vpop.f32.mrf.mxu0
      %v364 = vpop.f32.mrf.mxu0
      %365 = vdwg.mxu0
      %vm366 = vcmask 254976
      %367 = vst.msk [vmem:[%s297] sm:$0x3] %vm366, %v361
      %v368 = vld [vmem:[%s4] sm:$0xf]
      %v369 = vld [vmem:[%s4 + $0x4] sm:$0xf]
      %v370 = vld [vmem:[%s5] sm:$0x1]
      %v372 = vlaneseq
      %v373 = vshrl.u32 %v372, 7
      %v374 = vsub.s32 0, %v373
      %v375 = vrot.slane %v370, %v374
      %v379 = vunpack.c.l.b16 %v368
      %v380 = vunpack.c.l.b16 %v369
      %v381 = vpack.c.b16 %v380, %v379
      %v384 = vsel %vm322, %v306, 0
      %386 = vmatprep.subr.bf16.mxu0 0
      %387 = vmatpush1.bf16.msra.mxu0 0
      %388 = vmatprep.subr.bf16.mxu0 0
      %389 = vmatpush1.bf16.msra.mxu0 0
      %390 = vmatprep.subr.bf16.mxu0 0
      %391 = vmatpush1.bf16.msra.mxu0 0
      %392 = vmatprep.subr.bf16.mxu0 0
      %393 = vmatpush1.bf16.msra.mxu0 0
      %394 = vmatprep.subr.bf16.mxu0 0
      %395 = vmatpush1.bf16.msra.mxu0 0
      %396 = vmatprep.subr.bf16.mxu0 0
      %397 = vmatpush1.bf16.msra.mxu0 0
      %398 = vmatprep.subr.bf16.mxu0 0
      %399 = vmatpush1.bf16.msra.mxu0 0
      %400 = vmatprep.subr.bf16.mxu0 0
      %401 = vmatpush1.bf16.msra.mxu0 %v381
      %402 = vmatprep.subr.bf16.mxu0 0
      %403 = vmatpush2.bf16.msra.mxu0 0
      %404 = vmatprep.subr.bf16.mxu0 0
      %405 = vmatpush2.bf16.msra.mxu0 0
      %406 = vmatprep.subr.bf16.mxu0 0
      %407 = vmatpush2.bf16.msra.mxu0 0
      %408 = vmatprep.subr.bf16.mxu0 0
      %409 = vmatpush2.bf16.msra.mxu0 0
      %410 = vmatprep.subr.bf16.mxu0 0
      %411 = vmatpush2.bf16.msra.mxu0 0
      %412 = vmatprep.subr.bf16.mxu0 0
      %413 = vmatpush2.bf16.msra.mxu0 0
      %414 = vmatprep.subr.bf16.mxu0 0
      %415 = vmatpush2.bf16.msra.mxu0 0
      %416 = vmatprep.subr.bf16.mxu0 0
      %417 = vmatpush2.bf16.msra.mxu0 0
      %418 = vmatprep.mubr.bf16.mxu0 0
      %419 = vmatmul.mubr.bf16.gmra.mxu0 %v384
      %v420 = vpop.f32.mrf.mxu0
      %v421 = vadd.f32 %v375, %v420
      %v422 = vpop.f32.mrf.mxu0
      %v423 = vpop.f32.mrf.mxu0
      %v424 = vpop.f32.mrf.mxu0
      %425 = vdwg.mxu0
      %426 = vst.msk [vmem:[%s301] sm:$0x3] %vm366, %v421
      %p427 = scmp.lt.s32.totalorder %s19, 7
      %s428 = scalar_select %p427, %s19, 7
      %s429 = smul.addr %s428, 2
      %s430 = scalar_lea.vmem %s6, %s429
      %p431 = scmp.lt.s32.totalorder %s19, 7
      %s432 = scalar_select %p431, %s19, 7
      %s433 = smul.addr %s432, 2
      %s434 = scalar_lea.vmem %s7, %s433
      // Predicated region
      $region45: #{elmo_forward.7} parent=43 // pred_check
        %p435 = pneg %p173
      $region46: #{elmo_forward.7} parent=43 // pred_check_branch
        %437 = sbr.rel (%p435) target = $region48
      $region47: #{elmo_forward.7} parent=43 // pred_region
        _
      $region48: #{elmo_forward.7} parent=43 // pred_fallthru
        _
      // Predicated region
      $region49: #{elmo_forward.7} parent=43 // pred_check
        %p438 = pneg %p199
      $region50: #{elmo_forward.7} parent=43 // pred_check_branch
        %440 = sbr.rel (%p438) target = $region52
      $region51: #{elmo_forward.7} parent=43 // pred_region
        _
      $region52: #{elmo_forward.7} parent=43 // pred_fallthru
        _
    $region44: #{elmo_forward.7} parent=5 // pred_fallthru
      _
    %p441 = scmp.le.s32.totalorder 2, %s14
    // Predicated region
    $region53: #{elmo_forward.7} parent=5 // pred_check
      %p442 = pneg %p441
    $region54: #{elmo_forward.7} parent=5 // pred_check_branch
      %444 = sbr.rel (%p442) target = $region56
    $region55: #{elmo_forward.7} parent=5 // pred_region
      %s445 = ssub.s32 %s14, 2
      // Predicated region
      $region57: #{elmo_forward.7} parent=55 // pred_check
        %p446 = pneg %p179
      $region58: #{elmo_forward.7} parent=55 // pred_check_branch
        %448 = sbr.rel (%p446) target = $region60
      $region59: #{elmo_forward.7} parent=55 // pred_region
        %p449 = scmp.lt.s32.totalorder %s20, 7
        %s450 = scalar_select %p449, %s20, 7
        %s451 = smul.addr %s450, 2
        %s452 = scalar_lea.vmem %s6, %s451
      $region60: #{elmo_forward.7} parent=55 // pred_fallthru
        _
      // Predicated region
      $region61: #{elmo_forward.7} parent=55 // pred_check
        %p453 = pneg %p205
      $region62: #{elmo_forward.7} parent=55 // pred_check_branch
        %455 = sbr.rel (%p453) target = $region64
      $region63: #{elmo_forward.7} parent=55 // pred_region
        %p456 = scmp.lt.s32.totalorder %s20, 7
        %s457 = scalar_select %p456, %s20, 7
        %s458 = smul.addr %s457, 2
        %s459 = scalar_lea.vmem %s7, %s458
      $region64: #{elmo_forward.7} parent=55 // pred_fallthru
        _
    $region56: #{elmo_forward.7} parent=5 // pred_fallthru
      _
  $region6: #{elmo_forward.7} parent=0 // loop_footer
    %s18 = sadd.s32 1, %s14
  $region7: #{elmo_forward.7} parent=0 // loop_footer_branch
    %13 = sbr.rel target = $region3
  $region8: #{elmo_forward.7} parent=0 // loop_exit
    _

</llo_original>
